<compile_context>
chip_gen: v6e
topology: v6e:2x2x1
jax: 0.10.0
libtpu: 0.0.40
codegen_flags: <defaults>
</compile_context>

<pallas_src>
import functools
import math

import jax
import jax.numpy as jnp
from jax.experimental import pallas as pl
from jax.experimental.pallas import tpu as pltpu

EPS = 1e-5


# --------------------------------------------------------------------------- #
# helpers
# --------------------------------------------------------------------------- #
def _rmsnorm(x, w):
    # x: (S, D) f32, w: (D,) f32
    ms = jnp.mean(x * x, axis=-1, keepdims=True)
    return (x / jnp.sqrt(ms + EPS)) * w


def _vmem_capacity_bytes():
    """Physical VMEM per TensorCore (falls back to 128 MiB if the query fails)."""
    try:
        info = pltpu.get_tpu_info()
        for name in ("vmem_capacity_bytes", "vmem_bytes", "vmem_size_bytes"):
            v = getattr(info, name, None)
            if v:
                return int(v)
    except Exception:
        pass
    return 128 << 20


def _vmem_limit(request_bytes):
    """Clamp a requested VMEM budget to ~7/8 of physical VMEM (headroom for
    Mosaic internal scratch): ~56 MiB on v7x, ~112 MiB on v5e/v6e."""
    ceiling = (_vmem_capacity_bytes() * 7) // 8
    return int(max(16 << 20, min(ceiling, int(request_bytes))))


def _single_buffered(block_shape, index_map):
    """Weights whose index_map is constant across the grid never carry new data
    in a second pipeline buffer -- request a single buffer to halve their VMEM."""
    if hasattr(pl, "Buffered"):
        try:
            return pl.BlockSpec(block_shape, index_map, pipeline_mode=pl.Buffered(1))
        except TypeError:
            pass
    return pl.BlockSpec(block_shape, index_map)


def _pick_tile(n, max_tile=2048):
    """Largest multiple of 128 that divides n (n itself if it isn't 128-aligned,
    in which case the block equals the full dimension, which Mosaic allows)."""
    if n % 128 != 0:
        return n
    best, t = 128, 256
    while t <= min(n, max_tile):
        if n % t == 0:
            best = t
        t += 128
    return best


def _pick_kv_chunk(s):
    if s <= 512:
        return s
    for c in range(512, 0, -128):
        if s % c == 0:
            return c
    return s


# --------------------------------------------------------------------------- #
# attention sublayer kernel:  x <- x + W_o . softmax(causal QK^T) V
# --------------------------------------------------------------------------- #
def attn_block_kernel(x_ref, ln1_ref, wqkv_ref, wo_ref, o_ref,
                      qkv_ref, ctx_ref, *, num_heads, d_k, kv_chunk):
    x = x_ref[0]                                   # (S, D) f32 residual stream
    S, D = x.shape
    H = num_heads
    HD = H * d_k

    # pre-norm + single fused full-width QKV projection (scale folded into W_q).
    xn = _rmsnorm(x, ln1_ref[0]).astype(wqkv_ref.dtype)
    qkv_ref[...] = jnp.dot(xn, wqkv_ref[...], preferred_element_type=jnp.float32)

    n_kv = S // kv_chunk
    row = jax.lax.broadcasted_iota(jnp.int32, (S, kv_chunk), 0)
    col = jax.lax.broadcasted_iota(jnp.int32, (S, kv_chunk), 1)

    # Head loop is a static unroll (static lane slices only -- dynamic lane
    # offsets are avoided on purpose); per head, an online-softmax fori_loop
    # over KV chunks keeps only one (S, kv_chunk) score tile live at a time.
    for h in range(H):
        q_sl = slice(h * d_k, (h + 1) * d_k)
        k_sl = slice(HD + h * d_k, HD + (h + 1) * d_k)
        v_sl = slice(2 * HD + h * d_k, 2 * HD + (h + 1) * d_k)
        q = qkv_ref[:, q_sl].astype(jnp.bfloat16)          # (S, d_k)

        def kv_step(kc, carry, q=q, k_sl=k_sl, v_sl=v_sl):
            m, l, acc = carry
            r0 = pl.multiple_of(kc * kv_chunk, kv_chunk)
            k = qkv_ref[pl.ds(r0, kv_chunk), k_sl].astype(jnp.bfloat16)
            v = qkv_ref[pl.ds(r0, kv_chunk), v_sl].astype(jnp.bfloat16)
            s = jax.lax.dot_general(q, k, (((1,), (1,)), ((), ())),
                                    preferred_element_type=jnp.float32)
            # causal mask folded into the per-chunk compare (no (S,S) bias).
            s = jnp.where(col + r0 > row, jnp.float32(-1e30), s)
            m_new = jnp.maximum(m, jnp.max(s, axis=-1, keepdims=True))
            alpha = jnp.exp(m - m_new)
            p = jnp.exp(s - m_new)                          # f32 softmax math
            l_new = alpha * l + jnp.sum(p, axis=-1, keepdims=True)
            acc_new = alpha * acc + jnp.dot(p.astype(jnp.bfloat16), v,
                                            preferred_element_type=jnp.float32)
            return m_new, l_new, acc_new

        m0 = jnp.full((S, 1), -1e30, jnp.float32)
        l0 = jnp.zeros((S, 1), jnp.float32)
        a0 = jnp.zeros((S, d_k), jnp.float32)
        _, l, acc = jax.lax.fori_loop(0, n_kv, kv_step, (m0, l0, a0))

        # normalize AFTER P.V (EUP reciprocal, S*d_k muls) and write the head's
        # output straight into the context scratch -- no concatenate.
        ctx_ref[:, q_sl] = acc * pl.reciprocal(l, approx=True)

    attn = jnp.dot(ctx_ref[...].astype(wo_ref.dtype), wo_ref[...],
                   preferred_element_type=jnp.float32)      # (S, D)
    o_ref[0] = x + attn


def run_attn(x, layer, num_heads):
    B, S, D = x.shape
    three_hd = layer["wqkv"].shape[1]
    hd = three_hd // 3
    d_k = hd // num_heads
    kv_chunk = _pick_kv_chunk(S)

    kernel = functools.partial(attn_block_kernel, num_heads=num_heads,
                               d_k=d_k, kv_chunk=kv_chunk)

    vmem_req = (
        2 * (D * three_hd + hd * D)                 # bf16 weights, single-buffered
        + 2 * 2 * 4 * S * D                         # x in + out f32, double-buffered
        + 4 * S * (three_hd + hd)                   # qkv + ctx f32 scratch
        + 4 * S * (2 * D + 3 * kv_chunk + 3 * d_k)  # live values (xn, s, p, acc, ...)
        + (4 << 20))

    return pl.pallas_call(
        kernel,
        out_shape=jax.ShapeDtypeStruct((B, S, D), jnp.float32),
        grid=(B,),
        in_specs=[
            pl.BlockSpec((1, S, D), lambda b: (b, 0, 0)),          # x
            pl.BlockSpec((1, D), lambda b: (0, 0)),                # ln1
            _single_buffered((D, three_hd), lambda b: (0, 0)),     # W_qkv [D, 3*H*d_k]
            _single_buffered((hd, D), lambda b: (0, 0)),           # W_o   [H*d_k, D]
        ],
        out_specs=pl.BlockSpec((1, S, D), lambda b: (b, 0, 0)),
        scratch_shapes=[pltpu.VMEM((S, three_hd), jnp.float32),    # qkv
                        pltpu.VMEM((S, hd), jnp.float32)],         # attn context
        input_output_aliases={0: 0},       # residual stream reuses the input HBM buffer
        compiler_params=pltpu.CompilerParams(
            dimension_semantics=("parallel",),
            vmem_limit_bytes=_vmem_limit(vmem_req)),
    )(x, layer["ln1"], layer["wqkv"], layer["wo"])


# --------------------------------------------------------------------------- #
# FFN sublayer kernel (d_ff streamed):  x <- x + W2 . gelu(W1 . rmsnorm(x))
# --------------------------------------------------------------------------- #
def ffn_block_kernel(x_ref, ln2_ref, w1_ref, w2_ref, o_ref, xn_ref, acc_ref):
    f = pl.program_id(1)

    @pl.when(f == 0)
    def _():
        xn_ref[...] = _rmsnorm(x_ref[0], ln2_ref[0]).astype(xn_ref.dtype)
        acc_ref[...] = jnp.zeros_like(acc_ref)

    h = jnp.dot(xn_ref[...], w1_ref[...], preferred_element_type=jnp.float32)
    g = h * 0.5 * (1.0 + jax.lax.erf(h * (1.0 / math.sqrt(2.0))))   # erf-gelu
    acc_ref[...] += jnp.dot(g.astype(w2_ref.dtype), w2_ref[...],
                            preferred_element_type=jnp.float32)

    @pl.when(f == pl.num_programs(1) - 1)
    def _():
        o_ref[0] = x_ref[0] + acc_ref[...]


def run_ffn(x, layer):
    B, S, D = x.shape
    d_ff = layer["w1"].shape[1]
    t_ff = _pick_tile(d_ff)
    n_ff = d_ff // t_ff

    vmem_req = (
        2 * 2 * (D * t_ff + t_ff * D)   # bf16 W1/W2 tiles, double-buffered DMA
        + 2 * 2 * 4 * S * D             # x in + out f32, double-buffered
        + 6 * S * D                     # xn (bf16) + acc (f32) scratch
        + 2 * 4 * S * t_ff              # live h1 / gelu tiles
        + (4 << 20))

    return pl.pallas_call(
        ffn_block_kernel,
        out_shape=jax.ShapeDtypeStruct((B, S, D), jnp.float32),
        grid=(B, n_ff),
        in_specs=[
            pl.BlockSpec((1, S, D), lambda b, f: (b, 0, 0)),       # x
            pl.BlockSpec((1, D), lambda b, f: (0, 0)),             # ln2
            pl.BlockSpec((D, t_ff), lambda b, f: (0, f)),          # W1 tile [D, t_ff]
            pl.BlockSpec((t_ff, D), lambda b, f: (f, 0)),          # W2 tile [t_ff, D]
        ],
        out_specs=pl.BlockSpec((1, S, D), lambda b, f: (b, 0, 0)),
        scratch_shapes=[pltpu.VMEM((S, D), jnp.bfloat16),          # rmsnorm(x)
                        pltpu.VMEM((S, D), jnp.float32)],          # ffn accumulator
        input_output_aliases={0: 0},
        compiler_params=pltpu.CompilerParams(
            dimension_semantics=("parallel", "arbitrary"),
            vmem_limit_bytes=_vmem_limit(vmem_req)),
    )(x, layer["ln2"], layer["w1"], layer["w2"])


# --------------------------------------------------------------------------- #
# final RMSNorm + lm_head (vocab streamed, norm cached per batch row)
# --------------------------------------------------------------------------- #
def final_kernel(x_ref, lnf_ref, wlm_ref, o_ref, xn_ref):
    @pl.when(pl.program_id(1) == 0)
    def _():
        xn_ref[...] = _rmsnorm(x_ref[0], lnf_ref[0]).astype(xn_ref.dtype)

    o_ref[0] = jnp.dot(xn_ref[...], wlm_ref[...],
                       preferred_element_type=jnp.float32).astype(o_ref.dtype)


def run_final(x, lnf, wlm_t, out_dtype=jnp.float32):
    B, S, D = x.shape
    v_pad = wlm_t.shape[1]
    tv = _pick_tile(v_pad)
    out_bytes = jnp.dtype(out_dtype).itemsize

    vmem_req = (
        2 * 2 * D * tv                  # bf16 lm_head tile, double-buffered
        + 2 * 2 * 4 * S * D             # x, double-buffered
        + 2 * out_bytes * S * tv        # output tile, double-buffered
        + 2 * S * D + 4 * S * tv        # xn scratch + live logits tile
        + (4 << 20))

    return pl.pallas_call(
        final_kernel,
        out_shape=jax.ShapeDtypeStruct((B, S, v_pad), out_dtype),
        grid=(B, v_pad // tv),
        in_specs=[
            pl.BlockSpec((1, S, D), lambda b, v: (b, 0, 0)),
            pl.BlockSpec((1, D), lambda b, v: (0, 0)),
            pl.BlockSpec((D, tv), lambda b, v: (0, v)),            # streamed vocab tile
        ],
        out_specs=pl.BlockSpec((1, S, tv), lambda b, v: (b, 0, v)),
        scratch_shapes=[pltpu.VMEM((S, D), jnp.bfloat16)],         # cached rmsnorm(x)
        compiler_params=pltpu.CompilerParams(
            dimension_semantics=("parallel", "arbitrary"),
            vmem_limit_bytes=_vmem_limit(vmem_req)),
    )(x, lnf, wlm_t)


# --------------------------------------------------------------------------- #
# model glue
# --------------------------------------------------------------------------- #
def transformer_forward(tokens, params, *, num_heads, logits_dtype=jnp.float32):
    # embedding gather + learned position embedding add (no dropout at inference)
    S = tokens.shape[-1]
    x = (params["token_emb"][tokens] + params["pos_emb"][None, :S, :]).astype(jnp.float32)
    for layer in params["layers"]:
        x = run_attn(x, layer, num_heads)
        x = run_ffn(x, layer)
    logits = run_final(x, params["ln_final"], params["lm_head"], logits_dtype)
    vocab = params["token_emb"].shape[0]
    if logits.shape[-1] != vocab:
        logits = logits[..., :vocab]            # drop zero-weight vocab padding
    return logits


def init_params(key, *, vocab_size, context_length, num_layers, d_model, num_heads, d_ff):
    """PyTorch-convention f32 parameters (weights are [out_features, in_features])."""
    d_k = d_model // num_heads
    keys = jax.random.split(key, 2 + 4 * num_layers)
    params = {
        "token_emb": 0.02 * jax.random.normal(keys[0], (vocab_size, d_model), jnp.float32),
        "pos_emb": jnp.zeros((context_length, d_model), jnp.float32),  # torch.zeros init
        "ln_final": jnp.ones((d_model,), jnp.float32),
        "lm_head": 0.02 * jax.random.normal(keys[1], (vocab_size, d_model), jnp.float32),
        "layers": [],
    }
    for i in range(num_layers):
        k0, k1, k2, k3 = keys[2 + 4 * i:2 + 4 * (i + 1)]
        params["layers"].append({
            "ln1": jnp.ones((d_model,), jnp.float32),
            "wqkv": 0.05 * jax.random.normal(k0, (3, num_heads, d_k, d_model), jnp.float32),
            "wo": 0.05 * jax.random.normal(k1, (d_model, num_heads * d_k), jnp.float32),
            "ln2": jnp.ones((d_model,), jnp.float32),
            "w1": 0.05 * jax.random.normal(k2, (d_ff, d_model), jnp.float32),
            "w2": 0.05 * jax.random.normal(k3, (d_model, d_ff), jnp.float32),
        })
    return params


def preprocess_params(params):
    """One-time conversion to the kernel layout: weights transposed to
    [in_features, out_features], cast to bf16, 1/sqrt(d_k) folded into W_q,
    lm_head zero-padded to a 128-multiple vocab.  Norm weights stay f32."""
    lm = params["lm_head"]                                      # [V, D]
    V = lm.shape[0]
    v_pad = ((V + 127) // 128) * 128
    lm_t = lm.T.astype(jnp.bfloat16)                            # [D, V]
    if v_pad != V:
        lm_t = jnp.pad(lm_t, ((0, 0), (0, v_pad - V)))

    out = {
        "token_emb": params["token_emb"],
        "pos_emb": params["pos_emb"],
        "ln_final": params["ln_final"].reshape(1, -1).astype(jnp.float32),
        "lm_head": lm_t,                                        # [D, V_pad]
        "layers": [],
    }
    for layer in params["layers"]:
        wqkv = layer["wqkv"]                                    # [3, H, d_k, D]
        _, H, d_k, D = wqkv.shape
        wqkv = wqkv.at[0].multiply(1.0 / math.sqrt(d_k))        # fold attn scale into W_q
        wqkv_t = jnp.transpose(wqkv, (3, 0, 1, 2)).reshape(D, 3 * H * d_k)
        out["layers"].append({
            "ln1": layer["ln1"].reshape(1, -1).astype(jnp.float32),
            "wqkv": wqkv_t.astype(jnp.bfloat16),                # [D, 3*H*d_k]
            "wo": layer["wo"].T.astype(jnp.bfloat16),           # [H*d_k, D]
            "ln2": layer["ln2"].reshape(1, -1).astype(jnp.float32),
            "w1": layer["w1"].T.astype(jnp.bfloat16),           # [D, d_ff]
            "w2": layer["w2"].T.astype(jnp.bfloat16),           # [d_ff, D]
        })
    return out


if __name__ == "__main__":
    VOCAB, CTX, LAYERS, D_MODEL, HEADS, D_FF = 64, 16, 2, 32, 4, 64
    B, S = 2, 8

    key = jax.random.PRNGKey(0)
    pkey, tkey = jax.random.split(key)
    raw_params = init_params(pkey, vocab_size=VOCAB, context_length=CTX,
                             num_layers=LAYERS, d_model=D_MODEL,
                             num_heads=HEADS, d_ff=D_FF)
    params = preprocess_params(raw_params)
    tokens = jax.random.randint(tkey, (B, S), 0, VOCAB, dtype=jnp.int32)

    fwd = jax.jit(functools.partial(transformer_forward, num_heads=HEADS))
    logits = jax.block_until_ready(fwd(tokens, params))
    assert logits.shape == (B, S, VOCAB), logits.shape
    assert bool(jnp.all(jnp.isfinite(logits)))
    print("KERNEL_OK")
</pallas_src>

<mosaic_0001>
module attributes {stable_mosaic.version = 11 : i64} {
  func.func @attn_block_kernel(%arg0: i32, %arg1: memref<1x8x32xf32, #tpu.memory_space<vmem>>, %arg2: memref<1x32xf32, #tpu.memory_space<vmem>>, %arg3: memref<32x96xbf16, #tpu.memory_space<vmem>>, %arg4: memref<32x32xbf16, #tpu.memory_space<vmem>>, %arg5: memref<1x8x32xf32, #tpu.memory_space<vmem>>, %arg6: memref<8x96xf32, #tpu.memory_space<vmem>>, %arg7: memref<8x32xf32, #tpu.memory_space<vmem>>) attributes {dimension_semantics = [#tpu.dimension_semantics<parallel>], iteration_bounds = array<i64: 2>, scalar_prefetch = 0 : i64, scratch_operands = 2 : i64, tpu.core_type = #tpu.core_type<tc>, window_params = [{transform_indices = @transform_0, window_bounds = array<i64: 1, 8, 32>}, {pipeline_mode = #tpu.pipeline_mode<synchronous>, transform_indices = @transform_1, window_bounds = array<i64: 1, 32>}, {pipeline_mode = #tpu.pipeline_mode<synchronous>, transform_indices = @transform_2, window_bounds = array<i64: 32, 96>}, {pipeline_mode = #tpu.pipeline_mode<synchronous>, transform_indices = @transform_3, window_bounds = array<i64: 32, 32>}, {transform_indices = @transform_4, window_bounds = array<i64: 1, 8, 32>}]} {
    %c0 = arith.constant 0 : index
    %c0_0 = arith.constant 0 : index
    %c0_1 = arith.constant 0 : index
    %0 = vector.load %arg1[%c0, %c0_0, %c0_1] : memref<1x8x32xf32, #tpu.memory_space<vmem>>, vector<1x8x32xf32>
    %1 = vector.shape_cast %0 : vector<1x8x32xf32> to vector<8x32xf32>
    %c0_2 = arith.constant 0 : index
    %c0_3 = arith.constant 0 : index
    %2 = vector.load %arg2[%c0_2, %c0_3] : memref<1x32xf32, #tpu.memory_space<vmem>>, vector<1x32xf32>
    %3 = vector.shape_cast %2 : vector<1x32xf32> to vector<32xf32>
    %4 = arith.mulf %1, %1 : vector<8x32xf32>
    %cst = arith.constant dense<0.000000e+00> : vector<8xf32>
    %5 = vector.multi_reduction <add>, %4, %cst [1] : vector<8x32xf32> to vector<8xf32>
    %6 = vector.shape_cast %5 : vector<8xf32> to vector<8x1xf32>
    %cst_4 = arith.constant 3.200000e+01 : f32
    %7 = vector.broadcast %cst_4 : f32 to vector<8x1xf32>
    %8 = arith.divf %6, %7 : vector<8x1xf32>
    %cst_5 = arith.constant 9.99999974E-6 : f32
    %9 = vector.broadcast %cst_5 : f32 to vector<8x1xf32>
    %10 = arith.addf %8, %9 : vector<8x1xf32>
    %11 = math.sqrt %10 : vector<8x1xf32>
    %12 = vector.broadcast %11 : vector<8x1xf32> to vector<8x32xf32>
    %13 = arith.divf %1, %12 : vector<8x32xf32>
    %14 = vector.shape_cast %3 : vector<32xf32> to vector<1x32xf32>
    %15 = vector.broadcast %14 : vector<1x32xf32> to vector<8x32xf32>
    %16 = arith.mulf %13, %15 : vector<8x32xf32>
    %17 = arith.truncf %16 : vector<8x32xf32> to vector<8x32xbf16>
    %c0_6 = arith.constant 0 : index
    %c0_7 = arith.constant 0 : index
    %18 = vector.load %arg3[%c0_6, %c0_7] : memref<32x96xbf16, #tpu.memory_space<vmem>>, vector<32x96xbf16>
    %cst_8 = arith.constant dense<0.000000e+00> : vector<8x96xf32>
    %19 = tpu.matmul %17, %18, %cst_8 {dimension_numbers = #tpu.dot_dimension_numbers<[1], [0], [0], [1], [0, 0, 1, 1], [], []>} : vector<8x32xbf16>, vector<32x96xbf16>, vector<8x96xf32> -> vector<8x96xf32>
    %c0_9 = arith.constant 0 : index
    %c0_10 = arith.constant 0 : index
    %20 = vector.load %arg6[%c0_9, %c0_10] : memref<8x96xf32, #tpu.memory_space<vmem>>, vector<8x96xf32>
    tpu.vector_store %arg6[%c0_9, %c0_10], %19 {strides = array<i32>} : memref<8x96xf32, #tpu.memory_space<vmem>>, vector<8x96xf32>,
    %21 = tpu.iota {dimensions = array<i32: 0>} : vector<8x8xi32>
    %22 = tpu.iota {dimensions = array<i32: 1>} : vector<8x8xi32>
    %c0_11 = arith.constant 0 : index
    %c0_12 = arith.constant 0 : index
    %23 = vector.load %arg6[%c0_11, %c0_12] : memref<8x96xf32, #tpu.memory_space<vmem>>, vector<8x8xf32>
    %24 = arith.truncf %23 : vector<8x8xf32> to vector<8x8xbf16>
    %cst_13 = arith.constant -1.000000e+30 : f32
    %25 = vector.broadcast %cst_13 : f32 to vector<8x1xf32>
    %cst_14 = arith.constant 0.000000e+00 : f32
    %26 = vector.broadcast %cst_14 : f32 to vector<8x1xf32>
    %cst_15 = arith.constant 0.000000e+00 : f32
    %27 = vector.broadcast %cst_15 : f32 to vector<8x8xf32>
    %c0_i32 = arith.constant 0 : i32
    %c8_i32 = arith.constant 8 : i32
    %28 = arith.muli %c0_i32, %c8_i32 : i32
    %29 = tpu.assume_multiple %28, 8 : i32
    %30 = arith.index_cast %29 : i32 to index
    %c32 = arith.constant 32 : index
    %31 = vector.load %arg6[%30, %c32] : memref<8x96xf32, #tpu.memory_space<vmem>>, vector<8x8xf32>
    %32 = arith.truncf %31 : vector<8x8xf32> to vector<8x8xbf16>
    %33 = arith.index_cast %29 : i32 to index
    %c64 = arith.constant 64 : index
    %34 = vector.load %arg6[%33, %c64] : memref<8x96xf32, #tpu.memory_space<vmem>>, vector<8x8xf32>
    %35 = arith.truncf %34 : vector<8x8xf32> to vector<8x8xbf16>
    %cst_16 = arith.constant dense<0.000000e+00> : vector<8x8xf32>
    %36 = tpu.matmul %24, %32, %cst_16 {dimension_numbers = #tpu.dot_dimension_numbers<[1], [1], [0], [0], [0, 0, 1, 0], [], []>} : vector<8x8xbf16>, vector<8x8xbf16>, vector<8x8xf32> -> vector<8x8xf32>
    %37 = vector.broadcast %29 : i32 to vector<8x8xi32>
    %38 = arith.addi %22, %37 : vector<8x8xi32>
    %39 = arith.cmpi sgt, %38, %21 : vector<8x8xi32>
    %cst_17 = arith.constant -1.000000e+30 : f32
    %40 = vector.broadcast %cst_17 : f32 to vector<8x8xf32>
    %41 = arith.select %39, %40, %36 : vector<8x8xi1>, vector<8x8xf32>
    %cst_18 = arith.constant dense<0xFF800000> : vector<8xf32>
    %42 = vector.multi_reduction <maximumf>, %41, %cst_18 [1] : vector<8x8xf32> to vector<8xf32>
    %43 = vector.shape_cast %42 : vector<8xf32> to vector<8x1xf32>
    %44 = arith.maximumf %25, %43 : vector<8x1xf32>
    %45 = arith.subf %25, %44 : vector<8x1xf32>
    %46 = math.exp %45 : vector<8x1xf32>
    %47 = vector.broadcast %44 : vector<8x1xf32> to vector<8x8xf32>
    %48 = arith.subf %41, %47 : vector<8x8xf32>
    %49 = math.exp %48 : vector<8x8xf32>
    %50 = arith.mulf %46, %26 : vector<8x1xf32>
    %cst_19 = arith.constant dense<0.000000e+00> : vector<8xf32>
    %51 = vector.multi_reduction <add>, %49, %cst_19 [1] : vector<8x8xf32> to vector<8xf32>
    %52 = vector.shape_cast %51 : vector<8xf32> to vector<8x1xf32>
    %53 = arith.addf %50, %52 : vector<8x1xf32>
    %54 = vector.broadcast %46 : vector<8x1xf32> to vector<8x8xf32>
    %55 = arith.mulf %54, %27 : vector<8x8xf32>
    %56 = arith.truncf %49 : vector<8x8xf32> to vector<8x8xbf16>
    %cst_20 = arith.constant dense<0.000000e+00> : vector<8x8xf32>
    %57 = tpu.matmul %56, %35, %cst_20 {dimension_numbers = #tpu.dot_dimension_numbers<[1], [0], [0], [1], [0, 0, 1, 1], [], []>} : vector<8x8xbf16>, vector<8x8xbf16>, vector<8x8xf32> -> vector<8x8xf32>
    %58 = arith.addf %55, %57 : vector<8x8xf32>
    %c1_i32 = arith.constant 1 : i32
    %59 = tpu.reciprocal %53 {approx = true} : vector<8x1xf32> -> vector<8x1xf32>
    %60 = vector.broadcast %59 : vector<8x1xf32> to vector<8x8xf32>
    %61 = arith.mulf %58, %60 : vector<8x8xf32>
    %c0_21 = arith.constant 0 : index
    %c0_22 = arith.constant 0 : index
    %62 = vector.load %arg7[%c0_21, %c0_22] : memref<8x32xf32, #tpu.memory_space<vmem>>, vector<8x8xf32>
    tpu.vector_store %arg7[%c0_21, %c0_22], %61 {strides = array<i32>} : memref<8x32xf32, #tpu.memory_space<vmem>>, vector<8x8xf32>,
    %c0_23 = arith.constant 0 : index
    %c8 = arith.constant 8 : index
    %63 = vector.load %arg6[%c0_23, %c8] : memref<8x96xf32, #tpu.memory_space<vmem>>, vector<8x8xf32>
    %64 = arith.truncf %63 : vector<8x8xf32> to vector<8x8xbf16>
    %cst_24 = arith.constant -1.000000e+30 : f32
    %65 = vector.broadcast %cst_24 : f32 to vector<8x1xf32>
    %cst_25 = arith.constant 0.000000e+00 : f32
    %66 = vector.broadcast %cst_25 : f32 to vector<8x1xf32>
    %cst_26 = arith.constant 0.000000e+00 : f32
    %67 = vector.broadcast %cst_26 : f32 to vector<8x8xf32>
    %c0_i32_27 = arith.constant 0 : i32
    %c8_i32_28 = arith.constant 8 : i32
    %68 = arith.muli %c0_i32_27, %c8_i32_28 : i32
    %69 = tpu.assume_multiple %68, 8 : i32
    %70 = arith.index_cast %69 : i32 to index
    %c40 = arith.constant 40 : index
    %71 = vector.load %arg6[%70, %c40] : memref<8x96xf32, #tpu.memory_space<vmem>>, vector<8x8xf32>
    %72 = arith.truncf %71 : vector<8x8xf32> to vector<8x8xbf16>
    %73 = arith.index_cast %69 : i32 to index
    %c72 = arith.constant 72 : index
    %74 = vector.load %arg6[%73, %c72] : memref<8x96xf32, #tpu.memory_space<vmem>>, vector<8x8xf32>
    %75 = arith.truncf %74 : vector<8x8xf32> to vector<8x8xbf16>
    %cst_29 = arith.constant dense<0.000000e+00> : vector<8x8xf32>
    %76 = tpu.matmul %64, %72, %cst_29 {dimension_numbers = #tpu.dot_dimension_numbers<[1], [1], [0], [0], [0, 0, 1, 0], [], []>} : vector<8x8xbf16>, vector<8x8xbf16>, vector<8x8xf32> -> vector<8x8xf32>
    %77 = vector.broadcast %69 : i32 to vector<8x8xi32>
    %78 = arith.addi %22, %77 : vector<8x8xi32>
    %79 = arith.cmpi sgt, %78, %21 : vector<8x8xi32>
    %cst_30 = arith.constant -1.000000e+30 : f32
    %80 = vector.broadcast %cst_30 : f32 to vector<8x8xf32>
    %81 = arith.select %79, %80, %76 : vector<8x8xi1>, vector<8x8xf32>
    %cst_31 = arith.constant dense<0xFF800000> : vector<8xf32>
    %82 = vector.multi_reduction <maximumf>, %81, %cst_31 [1] : vector<8x8xf32> to vector<8xf32>
    %83 = vector.shape_cast %82 : vector<8xf32> to vector<8x1xf32>
    %84 = arith.maximumf %65, %83 : vector<8x1xf32>
    %85 = arith.subf %65, %84 : vector<8x1xf32>
    %86 = math.exp %85 : vector<8x1xf32>
    %87 = vector.broadcast %84 : vector<8x1xf32> to vector<8x8xf32>
    %88 = arith.subf %81, %87 : vector<8x8xf32>
    %89 = math.exp %88 : vector<8x8xf32>
    %90 = arith.mulf %86, %66 : vector<8x1xf32>
    %cst_32 = arith.constant dense<0.000000e+00> : vector<8xf32>
    %91 = vector.multi_reduction <add>, %89, %cst_32 [1] : vector<8x8xf32> to vector<8xf32>
    %92 = vector.shape_cast %91 : vector<8xf32> to vector<8x1xf32>
    %93 = arith.addf %90, %92 : vector<8x1xf32>
    %94 = vector.broadcast %86 : vector<8x1xf32> to vector<8x8xf32>
    %95 = arith.mulf %94, %67 : vector<8x8xf32>
    %96 = arith.truncf %89 : vector<8x8xf32> to vector<8x8xbf16>
    %cst_33 = arith.constant dense<0.000000e+00> : vector<8x8xf32>
    %97 = tpu.matmul %96, %75, %cst_33 {dimension_numbers = #tpu.dot_dimension_numbers<[1], [0], [0], [1], [0, 0, 1, 1], [], []>} : vector<8x8xbf16>, vector<8x8xbf16>, vector<8x8xf32> -> vector<8x8xf32>
    %98 = arith.addf %95, %97 : vector<8x8xf32>
    %c1_i32_34 = arith.constant 1 : i32
    %99 = tpu.reciprocal %93 {approx = true} : vector<8x1xf32> -> vector<8x1xf32>
    %100 = vector.broadcast %99 : vector<8x1xf32> to vector<8x8xf32>
    %101 = arith.mulf %98, %100 : vector<8x8xf32>
    %c0_35 = arith.constant 0 : index
    %c8_36 = arith.constant 8 : index
    %102 = vector.load %arg7[%c0_35, %c8_36] : memref<8x32xf32, #tpu.memory_space<vmem>>, vector<8x8xf32>
    tpu.vector_store %arg7[%c0_35, %c8_36], %101 {strides = array<i32>} : memref<8x32xf32, #tpu.memory_space<vmem>>, vector<8x8xf32>,
    %c0_37 = arith.constant 0 : index
    %c16 = arith.constant 16 : index
    %103 = vector.load %arg6[%c0_37, %c16] : memref<8x96xf32, #tpu.memory_space<vmem>>, vector<8x8xf32>
    %104 = arith.truncf %103 : vector<8x8xf32> to vector<8x8xbf16>
    %cst_38 = arith.constant -1.000000e+30 : f32
    %105 = vector.broadcast %cst_38 : f32 to vector<8x1xf32>
    %cst_39 = arith.constant 0.000000e+00 : f32
    %106 = vector.broadcast %cst_39 : f32 to vector<8x1xf32>
    %cst_40 = arith.constant 0.000000e+00 : f32
    %107 = vector.broadcast %cst_40 : f32 to vector<8x8xf32>
    %c0_i32_41 = arith.constant 0 : i32
    %c8_i32_42 = arith.constant 8 : i32
    %108 = arith.muli %c0_i32_41, %c8_i32_42 : i32
    %109 = tpu.assume_multiple %108, 8 : i32
    %110 = arith.index_cast %109 : i32 to index
    %c48 = arith.constant 48 : index
    %111 = vector.load %arg6[%110, %c48] : memref<8x96xf32, #tpu.memory_space<vmem>>, vector<8x8xf32>
    %112 = arith.truncf %111 : vector<8x8xf32> to vector<8x8xbf16>
    %113 = arith.index_cast %109 : i32 to index
    %c80 = arith.constant 80 : index
    %114 = vector.load %arg6[%113, %c80] : memref<8x96xf32, #tpu.memory_space<vmem>>, vector<8x8xf32>
    %115 = arith.truncf %114 : vector<8x8xf32> to vector<8x8xbf16>
    %cst_43 = arith.constant dense<0.000000e+00> : vector<8x8xf32>
    %116 = tpu.matmul %104, %112, %cst_43 {dimension_numbers = #tpu.dot_dimension_numbers<[1], [1], [0], [0], [0, 0, 1, 0], [], []>} : vector<8x8xbf16>, vector<8x8xbf16>, vector<8x8xf32> -> vector<8x8xf32>
    %117 = vector.broadcast %109 : i32 to vector<8x8xi32>
    %118 = arith.addi %22, %117 : vector<8x8xi32>
    %119 = arith.cmpi sgt, %118, %21 : vector<8x8xi32>
    %cst_44 = arith.constant -1.000000e+30 : f32
    %120 = vector.broadcast %cst_44 : f32 to vector<8x8xf32>
    %121 = arith.select %119, %120, %116 : vector<8x8xi1>, vector<8x8xf32>
    %cst_45 = arith.constant dense<0xFF800000> : vector<8xf32>
    %122 = vector.multi_reduction <maximumf>, %121, %cst_45 [1] : vector<8x8xf32> to vector<8xf32>
    %123 = vector.shape_cast %122 : vector<8xf32> to vector<8x1xf32>
    %124 = arith.maximumf %105, %123 : vector<8x1xf32>
    %125 = arith.subf %105, %124 : vector<8x1xf32>
    %126 = math.exp %125 : vector<8x1xf32>
    %127 = vector.broadcast %124 : vector<8x1xf32> to vector<8x8xf32>
    %128 = arith.subf %121, %127 : vector<8x8xf32>
    %129 = math.exp %128 : vector<8x8xf32>
    %130 = arith.mulf %126, %106 : vector<8x1xf32>
    %cst_46 = arith.constant dense<0.000000e+00> : vector<8xf32>
    %131 = vector.multi_reduction <add>, %129, %cst_46 [1] : vector<8x8xf32> to vector<8xf32>
    %132 = vector.shape_cast %131 : vector<8xf32> to vector<8x1xf32>
    %133 = arith.addf %130, %132 : vector<8x1xf32>
    %134 = vector.broadcast %126 : vector<8x1xf32> to vector<8x8xf32>
    %135 = arith.mulf %134, %107 : vector<8x8xf32>
    %136 = arith.truncf %129 : vector<8x8xf32> to vector<8x8xbf16>
    %cst_47 = arith.constant dense<0.000000e+00> : vector<8x8xf32>
    %137 = tpu.matmul %136, %115, %cst_47 {dimension_numbers = #tpu.dot_dimension_numbers<[1], [0], [0], [1], [0, 0, 1, 1], [], []>} : vector<8x8xbf16>, vector<8x8xbf16>, vector<8x8xf32> -> vector<8x8xf32>
    %138 = arith.addf %135, %137 : vector<8x8xf32>
    %c1_i32_48 = arith.constant 1 : i32
    %139 = tpu.reciprocal %133 {approx = true} : vector<8x1xf32> -> vector<8x1xf32>
    %140 = vector.broadcast %139 : vector<8x1xf32> to vector<8x8xf32>
    %141 = arith.mulf %138, %140 : vector<8x8xf32>
    %c0_49 = arith.constant 0 : index
    %c16_50 = arith.constant 16 : index
    %142 = vector.load %arg7[%c0_49, %c16_50] : memref<8x32xf32, #tpu.memory_space<vmem>>, vector<8x8xf32>
    tpu.vector_store %arg7[%c0_49, %c16_50], %141 {strides = array<i32>} : memref<8x32xf32, #tpu.memory_space<vmem>>, vector<8x8xf32>,
    %c0_51 = arith.constant 0 : index
    %c24 = arith.constant 24 : index
    %143 = vector.load %arg6[%c0_51, %c24] : memref<8x96xf32, #tpu.memory_space<vmem>>, vector<8x8xf32>
    %144 = arith.truncf %143 : vector<8x8xf32> to vector<8x8xbf16>
    %cst_52 = arith.constant -1.000000e+30 : f32
    %145 = vector.broadcast %cst_52 : f32 to vector<8x1xf32>
    %cst_53 = arith.constant 0.000000e+00 : f32
    %146 = vector.broadcast %cst_53 : f32 to vector<8x1xf32>
    %cst_54 = arith.constant 0.000000e+00 : f32
    %147 = vector.broadcast %cst_54 : f32 to vector<8x8xf32>
    %c0_i32_55 = arith.constant 0 : i32
    %c8_i32_56 = arith.constant 8 : i32
    %148 = arith.muli %c0_i32_55, %c8_i32_56 : i32
    %149 = tpu.assume_multiple %148, 8 : i32
    %150 = arith.index_cast %149 : i32 to index
    %c56 = arith.constant 56 : index
    %151 = vector.load %arg6[%150, %c56] : memref<8x96xf32, #tpu.memory_space<vmem>>, vector<8x8xf32>
    %152 = arith.truncf %151 : vector<8x8xf32> to vector<8x8xbf16>
    %153 = arith.index_cast %149 : i32 to index
    %c88 = arith.constant 88 : index
    %154 = vector.load %arg6[%153, %c88] : memref<8x96xf32, #tpu.memory_space<vmem>>, vector<8x8xf32>
    %155 = arith.truncf %154 : vector<8x8xf32> to vector<8x8xbf16>
    %cst_57 = arith.constant dense<0.000000e+00> : vector<8x8xf32>
    %156 = tpu.matmul %144, %152, %cst_57 {dimension_numbers = #tpu.dot_dimension_numbers<[1], [1], [0], [0], [0, 0, 1, 0], [], []>} : vector<8x8xbf16>, vector<8x8xbf16>, vector<8x8xf32> -> vector<8x8xf32>
    %157 = vector.broadcast %149 : i32 to vector<8x8xi32>
    %158 = arith.addi %22, %157 : vector<8x8xi32>
    %159 = arith.cmpi sgt, %158, %21 : vector<8x8xi32>
    %cst_58 = arith.constant -1.000000e+30 : f32
    %160 = vector.broadcast %cst_58 : f32 to vector<8x8xf32>
    %161 = arith.select %159, %160, %156 : vector<8x8xi1>, vector<8x8xf32>
    %cst_59 = arith.constant dense<0xFF800000> : vector<8xf32>
    %162 = vector.multi_reduction <maximumf>, %161, %cst_59 [1] : vector<8x8xf32> to vector<8xf32>
    %163 = vector.shape_cast %162 : vector<8xf32> to vector<8x1xf32>
    %164 = arith.maximumf %145, %163 : vector<8x1xf32>
    %165 = arith.subf %145, %164 : vector<8x1xf32>
    %166 = math.exp %165 : vector<8x1xf32>
    %167 = vector.broadcast %164 : vector<8x1xf32> to vector<8x8xf32>
    %168 = arith.subf %161, %167 : vector<8x8xf32>
    %169 = math.exp %168 : vector<8x8xf32>
    %170 = arith.mulf %166, %146 : vector<8x1xf32>
    %cst_60 = arith.constant dense<0.000000e+00> : vector<8xf32>
    %171 = vector.multi_reduction <add>, %169, %cst_60 [1] : vector<8x8xf32> to vector<8xf32>
    %172 = vector.shape_cast %171 : vector<8xf32> to vector<8x1xf32>
    %173 = arith.addf %170, %172 : vector<8x1xf32>
    %174 = vector.broadcast %166 : vector<8x1xf32> to vector<8x8xf32>
    %175 = arith.mulf %174, %147 : vector<8x8xf32>
    %176 = arith.truncf %169 : vector<8x8xf32> to vector<8x8xbf16>
    %cst_61 = arith.constant dense<0.000000e+00> : vector<8x8xf32>
    %177 = tpu.matmul %176, %155, %cst_61 {dimension_numbers = #tpu.dot_dimension_numbers<[1], [0], [0], [1], [0, 0, 1, 1], [], []>} : vector<8x8xbf16>, vector<8x8xbf16>, vector<8x8xf32> -> vector<8x8xf32>
    %178 = arith.addf %175, %177 : vector<8x8xf32>
    %c1_i32_62 = arith.constant 1 : i32
    %179 = tpu.reciprocal %173 {approx = true} : vector<8x1xf32> -> vector<8x1xf32>
    %180 = vector.broadcast %179 : vector<8x1xf32> to vector<8x8xf32>
    %181 = arith.mulf %178, %180 : vector<8x8xf32>
    %c0_63 = arith.constant 0 : index
    %c24_64 = arith.constant 24 : index
    %182 = vector.load %arg7[%c0_63, %c24_64] : memref<8x32xf32, #tpu.memory_space<vmem>>, vector<8x8xf32>
    tpu.vector_store %arg7[%c0_63, %c24_64], %181 {strides = array<i32>} : memref<8x32xf32, #tpu.memory_space<vmem>>, vector<8x8xf32>,
    %c0_65 = arith.constant 0 : index
    %c0_66 = arith.constant 0 : index
    %183 = vector.load %arg7[%c0_65, %c0_66] : memref<8x32xf32, #tpu.memory_space<vmem>>, vector<8x32xf32>
    %184 = arith.truncf %183 : vector<8x32xf32> to vector<8x32xbf16>
    %c0_67 = arith.constant 0 : index
    %c0_68 = arith.constant 0 : index
    %185 = vector.load %arg4[%c0_67, %c0_68] : memref<32x32xbf16, #tpu.memory_space<vmem>>, vector<32x32xbf16>
    %cst_69 = arith.constant dense<0.000000e+00> : vector<8x32xf32>
    %186 = tpu.matmul %184, %185, %cst_69 {dimension_numbers = #tpu.dot_dimension_numbers<[1], [0], [0], [1], [0, 0, 1, 1], [], []>} : vector<8x32xbf16>, vector<32x32xbf16>, vector<8x32xf32> -> vector<8x32xf32>
    %187 = arith.addf %1, %186 : vector<8x32xf32>
    %c0_70 = arith.constant 0 : index
    %c0_71 = arith.constant 0 : index
    %c0_72 = arith.constant 0 : index
    %188 = vector.load %arg5[%c0_70, %c0_71, %c0_72] : memref<1x8x32xf32, #tpu.memory_space<vmem>>, vector<1x8x32xf32>
    %189 = vector.shape_cast %188 : vector<1x8x32xf32> to vector<8x32xf32>
    %190 = vector.shape_cast %187 : vector<8x32xf32> to vector<1x8x32xf32>
    tpu.vector_store %arg5[%c0_70, %c0_71, %c0_72], %190 {strides = array<i32>} : memref<1x8x32xf32, #tpu.memory_space<vmem>>, vector<1x8x32xf32>,
    return
  }
  func.func @transform_0(%arg0: i32) -> (i32, i32, i32) {
    %c0_i32 = arith.constant 0 : i32
    %c0_i32_0 = arith.constant 0 : i32
    %c0_i32_1 = arith.constant 0 : i32
    return %arg0, %c0_i32, %c0_i32_0 : i32, i32, i32
  }
  func.func @transform_1(%arg0: i32) -> (i32, i32) {
    %c0_i32 = arith.constant 0 : i32
    %c0_i32_0 = arith.constant 0 : i32
    %c0_i32_1 = arith.constant 0 : i32
    return %c0_i32, %c0_i32_0 : i32, i32
  }
  func.func @transform_2(%arg0: i32) -> (i32, i32) {
    %c0_i32 = arith.constant 0 : i32
    %c0_i32_0 = arith.constant 0 : i32
    %c0_i32_1 = arith.constant 0 : i32
    return %c0_i32, %c0_i32_0 : i32, i32
  }
  func.func @transform_3(%arg0: i32) -> (i32, i32) {
    %c0_i32 = arith.constant 0 : i32
    %c0_i32_0 = arith.constant 0 : i32
    %c0_i32_1 = arith.constant 0 : i32
    return %c0_i32, %c0_i32_0 : i32, i32
  }
  func.func @transform_4(%arg0: i32) -> (i32, i32, i32) {
    %c0_i32 = arith.constant 0 : i32
    %c0_i32_0 = arith.constant 0 : i32
    %c0_i32_1 = arith.constant 0 : i32
    return %arg0, %c0_i32, %c0_i32_0 : i32, i32, i32
  }
}

module attributes {stable_mosaic.version = 11 : i64} {
  func.func @final_kernel(%arg0: i32, %arg1: i32, %arg2: memref<1x8x32xf32, #tpu.memory_space<vmem>>, %arg3: memref<1x32xf32, #tpu.memory_space<vmem>>, %arg4: memref<32x128xbf16, #tpu.memory_space<vmem>>, %arg5: memref<1x8x128xf32, #tpu.memory_space<vmem>>, %arg6: memref<8x32xbf16, #tpu.memory_space<vmem>>) attributes {dimension_semantics = [#tpu.dimension_semantics<parallel>, #tpu.dimension_semantics<arbitrary>], iteration_bounds = array<i64: 2, 1>, scalar_prefetch = 0 : i64, scratch_operands = 1 : i64, tpu.core_type = #tpu.core_type<tc>, window_params = [{transform_indices = @transform_0, window_bounds = array<i64: 1, 8, 32>}, {pipeline_mode = #tpu.pipeline_mode<synchronous>, transform_indices = @transform_1, window_bounds = array<i64: 1, 32>}, {transform_indices = @transform_2, window_bounds = array<i64: 32, 128>}, {transform_indices = @transform_3, window_bounds = array<i64: 1, 8, 128>}]} {
    %c0_i32 = arith.constant 0 : i32
    %0 = arith.cmpi eq, %arg1, %c0_i32 : i32
    %1 = arith.extui %0 : i1 to i32
    %c0_i32_0 = arith.constant 0 : i32
    %2 = arith.cmpi ne, %1, %c0_i32_0 : i32
    scf.if %2 {
      %c0_7 = arith.constant 0 : index
      %c0_8 = arith.constant 0 : index
      %c0_9 = arith.constant 0 : index
      %9 = vector.load %arg2[%c0_7, %c0_8, %c0_9] : memref<1x8x32xf32, #tpu.memory_space<vmem>>, vector<1x8x32xf32>
      %10 = vector.shape_cast %9 : vector<1x8x32xf32> to vector<8x32xf32>
      %c0_10 = arith.constant 0 : index
      %c0_11 = arith.constant 0 : index
      %11 = vector.load %arg3[%c0_10, %c0_11] : memref<1x32xf32, #tpu.memory_space<vmem>>, vector<1x32xf32>
      %12 = vector.shape_cast %11 : vector<1x32xf32> to vector<32xf32>
      %13 = arith.mulf %10, %10 : vector<8x32xf32>
      %cst_12 = arith.constant dense<0.000000e+00> : vector<8xf32>
      %14 = vector.multi_reduction <add>, %13, %cst_12 [1] : vector<8x32xf32> to vector<8xf32>
      %15 = vector.shape_cast %14 : vector<8xf32> to vector<8x1xf32>
      %cst_13 = arith.constant 3.200000e+01 : f32
      %16 = vector.broadcast %cst_13 : f32 to vector<8x1xf32>
      %17 = arith.divf %15, %16 : vector<8x1xf32>
      %cst_14 = arith.constant 9.99999974E-6 : f32
      %18 = vector.broadcast %cst_14 : f32 to vector<8x1xf32>
      %19 = arith.addf %17, %18 : vector<8x1xf32>
      %20 = math.sqrt %19 : vector<8x1xf32>
      %21 = vector.broadcast %20 : vector<8x1xf32> to vector<8x32xf32>
      %22 = arith.divf %10, %21 : vector<8x32xf32>
      %23 = vector.shape_cast %12 : vector<32xf32> to vector<1x32xf32>
      %24 = vector.broadcast %23 : vector<1x32xf32> to vector<8x32xf32>
      %25 = arith.mulf %22, %24 : vector<8x32xf32>
      %26 = arith.truncf %25 : vector<8x32xf32> to vector<8x32xbf16>
      %c0_15 = arith.constant 0 : index
      %c0_16 = arith.constant 0 : index
      %27 = vector.load %arg6[%c0_15, %c0_16] : memref<8x32xbf16, #tpu.memory_space<vmem>>, vector<8x32xbf16>
      tpu.vector_store %arg6[%c0_15, %c0_16], %26 {strides = array<i32>} : memref<8x32xbf16, #tpu.memory_space<vmem>>, vector<8x32xbf16>,
    } else {
    }
    %c0 = arith.constant 0 : index
    %c0_1 = arith.constant 0 : index
    %3 = vector.load %arg6[%c0, %c0_1] : memref<8x32xbf16, #tpu.memory_space<vmem>>, vector<8x32xbf16>
    %c0_2 = arith.constant 0 : index
    %c0_3 = arith.constant 0 : index
    %4 = vector.load %arg4[%c0_2, %c0_3] : memref<32x128xbf16, #tpu.memory_space<vmem>>, vector<32x128xbf16>
    %cst = arith.constant dense<0.000000e+00> : vector<8x128xf32>
    %5 = tpu.matmul %3, %4, %cst {dimension_numbers = #tpu.dot_dimension_numbers<[1], [0], [0], [1], [0, 0, 1, 1], [], []>} : vector<8x32xbf16>, vector<32x128xbf16>, vector<8x128xf32> -> vector<8x128xf32>
    %c0_4 = arith.constant 0 : index
    %c0_5 = arith.constant 0 : index
    %c0_6 = arith.constant 0 : index
    %6 = vector.load %arg5[%c0_4, %c0_5, %c0_6] : memref<1x8x128xf32, #tpu.memory_space<vmem>>, vector<1x8x128xf32>
    %7 = vector.shape_cast %6 : vector<1x8x128xf32> to vector<8x128xf32>
    %8 = vector.shape_cast %5 : vector<8x128xf32> to vector<1x8x128xf32>
    tpu.vector_store %arg5[%c0_4, %c0_5, %c0_6], %8 {strides = array<i32>} : memref<1x8x128xf32, #tpu.memory_space<vmem>>, vector<1x8x128xf32>,
    return
  }
  func.func @transform_0(%arg0: i32, %arg1: i32) -> (i32, i32, i32) {
    %c0_i32 = arith.constant 0 : i32
    %c0_i32_0 = arith.constant 0 : i32
    %c0_i32_1 = arith.constant 0 : i32
    return %arg0, %c0_i32, %c0_i32_0 : i32, i32, i32
  }
  func.func @transform_1(%arg0: i32, %arg1: i32) -> (i32, i32) {
    %c0_i32 = arith.constant 0 : i32
    %c0_i32_0 = arith.constant 0 : i32
    %c0_i32_1 = arith.constant 0 : i32
    return %c0_i32, %c0_i32_0 : i32, i32
  }
  func.func @transform_2(%arg0: i32, %arg1: i32) -> (i32, i32) {
    %c0_i32 = arith.constant 0 : i32
    %c0_i32_0 = arith.constant 0 : i32
    return %c0_i32, %arg1 : i32, i32
  }
  func.func @transform_3(%arg0: i32, %arg1: i32) -> (i32, i32, i32) {
    %c0_i32 = arith.constant 0 : i32
    %c0_i32_0 = arith.constant 0 : i32
    return %arg0, %c0_i32, %arg1 : i32, i32, i32
  }
}

module attributes {stable_mosaic.version = 11 : i64} {
  func.func @ffn_block_kernel(%arg0: i32, %arg1: i32, %arg2: memref<1x8x32xf32, #tpu.memory_space<vmem>>, %arg3: memref<1x32xf32, #tpu.memory_space<vmem>>, %arg4: memref<32x64xbf16, #tpu.memory_space<vmem>>, %arg5: memref<64x32xbf16, #tpu.memory_space<vmem>>, %arg6: memref<1x8x32xf32, #tpu.memory_space<vmem>>, %arg7: memref<8x32xbf16, #tpu.memory_space<vmem>>, %arg8: memref<8x32xf32, #tpu.memory_space<vmem>>) attributes {dimension_semantics = [#tpu.dimension_semantics<parallel>, #tpu.dimension_semantics<arbitrary>], iteration_bounds = array<i64: 2, 1>, scalar_prefetch = 0 : i64, scratch_operands = 2 : i64, tpu.core_type = #tpu.core_type<tc>, window_params = [{transform_indices = @transform_0, window_bounds = array<i64: 1, 8, 32>}, {pipeline_mode = #tpu.pipeline_mode<synchronous>, transform_indices = @transform_1, window_bounds = array<i64: 1, 32>}, {transform_indices = @transform_2, window_bounds = array<i64: 32, 64>}, {transform_indices = @transform_3, window_bounds = array<i64: 64, 32>}, {transform_indices = @transform_4, window_bounds = array<i64: 1, 8, 32>}]} {
    %c0_i32 = arith.constant 0 : i32
    %0 = arith.cmpi eq, %arg1, %c0_i32 : i32
    %1 = arith.extui %0 : i1 to i32
    %c0_i32_0 = arith.constant 0 : i32
    %2 = arith.cmpi ne, %1, %c0_i32_0 : i32
    scf.if %2 {
      %c0_16 = arith.constant 0 : index
      %c0_17 = arith.constant 0 : index
      %c0_18 = arith.constant 0 : index
      %23 = vector.load %arg2[%c0_16, %c0_17, %c0_18] : memref<1x8x32xf32, #tpu.memory_space<vmem>>, vector<1x8x32xf32>
      %24 = vector.shape_cast %23 : vector<1x8x32xf32> to vector<8x32xf32>
      %c0_19 = arith.constant 0 : index
      %c0_20 = arith.constant 0 : index
      %25 = vector.load %arg3[%c0_19, %c0_20] : memref<1x32xf32, #tpu.memory_space<vmem>>, vector<1x32xf32>
      %26 = vector.shape_cast %25 : vector<1x32xf32> to vector<32xf32>
      %27 = arith.mulf %24, %24 : vector<8x32xf32>
      %cst_21 = arith.constant dense<0.000000e+00> : vector<8xf32>
      %28 = vector.multi_reduction <add>, %27, %cst_21 [1] : vector<8x32xf32> to vector<8xf32>
      %29 = vector.shape_cast %28 : vector<8xf32> to vector<8x1xf32>
      %cst_22 = arith.constant 3.200000e+01 : f32
      %30 = vector.broadcast %cst_22 : f32 to vector<8x1xf32>
      %31 = arith.divf %29, %30 : vector<8x1xf32>
      %cst_23 = arith.constant 9.99999974E-6 : f32
      %32 = vector.broadcast %cst_23 : f32 to vector<8x1xf32>
      %33 = arith.addf %31, %32 : vector<8x1xf32>
      %34 = math.sqrt %33 : vector<8x1xf32>
      %35 = vector.broadcast %34 : vector<8x1xf32> to vector<8x32xf32>
      %36 = arith.divf %24, %35 : vector<8x32xf32>
      %37 = vector.shape_cast %26 : vector<32xf32> to vector<1x32xf32>
      %38 = vector.broadcast %37 : vector<1x32xf32> to vector<8x32xf32>
      %39 = arith.mulf %36, %38 : vector<8x32xf32>
      %40 = arith.truncf %39 : vector<8x32xf32> to vector<8x32xbf16>
      %c0_24 = arith.constant 0 : index
      %c0_25 = arith.constant 0 : index
      %41 = vector.load %arg7[%c0_24, %c0_25] : memref<8x32xbf16, #tpu.memory_space<vmem>>, vector<8x32xbf16>
      tpu.vector_store %arg7[%c0_24, %c0_25], %40 {strides = array<i32>} : memref<8x32xbf16, #tpu.memory_space<vmem>>, vector<8x32xbf16>,
      %cst_26 = arith.constant 0.000000e+00 : f32
      %42 = vector.broadcast %cst_26 : f32 to vector<8x32xf32>
      %c0_27 = arith.constant 0 : index
      %c0_28 = arith.constant 0 : index
      %43 = vector.load %arg8[%c0_27, %c0_28] : memref<8x32xf32, #tpu.memory_space<vmem>>, vector<8x32xf32>
      tpu.vector_store %arg8[%c0_27, %c0_28], %42 {strides = array<i32>} : memref<8x32xf32, #tpu.memory_space<vmem>>, vector<8x32xf32>,
    } else {
    }
    %c0 = arith.constant 0 : index
    %c0_1 = arith.constant 0 : index
    %3 = vector.load %arg7[%c0, %c0_1] : memref<8x32xbf16, #tpu.memory_space<vmem>>, vector<8x32xbf16>
    %c0_2 = arith.constant 0 : index
    %c0_3 = arith.constant 0 : index
    %4 = vector.load %arg4[%c0_2, %c0_3] : memref<32x64xbf16, #tpu.memory_space<vmem>>, vector<32x64xbf16>
    %cst = arith.constant dense<0.000000e+00> : vector<8x64xf32>
    %5 = tpu.matmul %3, %4, %cst {dimension_numbers = #tpu.dot_dimension_numbers<[1], [0], [0], [1], [0, 0, 1, 1], [], []>} : vector<8x32xbf16>, vector<32x64xbf16>, vector<8x64xf32> -> vector<8x64xf32>
    %cst_4 = arith.constant 5.000000e-01 : f32
    %6 = vector.broadcast %cst_4 : f32 to vector<8x64xf32>
    %7 = arith.mulf %5, %6 : vector<8x64xf32>
    %cst_5 = arith.constant 0.707106769 : f32
    %8 = vector.broadcast %cst_5 : f32 to vector<8x64xf32>
    %9 = arith.mulf %5, %8 : vector<8x64xf32>
    %10 = math.erf %9 : vector<8x64xf32>
    %cst_6 = arith.constant 1.000000e+00 : f32
    %11 = vector.broadcast %cst_6 : f32 to vector<8x64xf32>
    %12 = arith.addf %11, %10 : vector<8x64xf32>
    %13 = arith.mulf %7, %12 : vector<8x64xf32>
    %c0_7 = arith.constant 0 : index
    %c0_8 = arith.constant 0 : index
    %14 = vector.load %arg8[%c0_7, %c0_8] : memref<8x32xf32, #tpu.memory_space<vmem>>, vector<8x32xf32>
    %15 = arith.truncf %13 : vector<8x64xf32> to vector<8x64xbf16>
    %c0_9 = arith.constant 0 : index
    %c0_10 = arith.constant 0 : index
    %16 = vector.load %arg5[%c0_9, %c0_10] : memref<64x32xbf16, #tpu.memory_space<vmem>>, vector<64x32xbf16>
    %cst_11 = arith.constant dense<0.000000e+00> : vector<8x32xf32>
    %17 = tpu.matmul %15, %16, %cst_11 {dimension_numbers = #tpu.dot_dimension_numbers<[1], [0], [0], [1], [0, 0, 1, 1], [], []>} : vector<8x64xbf16>, vector<64x32xbf16>, vector<8x32xf32> -> vector<8x32xf32>
    %18 = arith.addf %14, %17 : vector<8x32xf32>
    %c0_12 = arith.constant 0 : index
    %c0_13 = arith.constant 0 : index
    %19 = vector.load %arg8[%c0_12, %c0_13] : memref<8x32xf32, #tpu.memory_space<vmem>>, vector<8x32xf32>
    tpu.vector_store %arg8[%c0_12, %c0_13], %18 {strides = array<i32>} : memref<8x32xf32, #tpu.memory_space<vmem>>, vector<8x32xf32>,
    %c0_i32_14 = arith.constant 0 : i32
    %20 = arith.cmpi eq, %arg1, %c0_i32_14 : i32
    %21 = arith.extui %20 : i1 to i32
    %c0_i32_15 = arith.constant 0 : i32
    %22 = arith.cmpi ne, %21, %c0_i32_15 : i32
    scf.if %22 {
      %c0_16 = arith.constant 0 : index
      %c0_17 = arith.constant 0 : index
      %c0_18 = arith.constant 0 : index
      %23 = vector.load %arg2[%c0_16, %c0_17, %c0_18] : memref<1x8x32xf32, #tpu.memory_space<vmem>>, vector<1x8x32xf32>
      %24 = vector.shape_cast %23 : vector<1x8x32xf32> to vector<8x32xf32>
      %c0_19 = arith.constant 0 : index
      %c0_20 = arith.constant 0 : index
      %25 = vector.load %arg8[%c0_19, %c0_20] : memref<8x32xf32, #tpu.memory_space<vmem>>, vector<8x32xf32>
      %26 = arith.addf %24, %25 : vector<8x32xf32>
      %c0_21 = arith.constant 0 : index
      %c0_22 = arith.constant 0 : index
      %c0_23 = arith.constant 0 : index
      %27 = vector.load %arg6[%c0_21, %c0_22, %c0_23] : memref<1x8x32xf32, #tpu.memory_space<vmem>>, vector<1x8x32xf32>
      %28 = vector.shape_cast %27 : vector<1x8x32xf32> to vector<8x32xf32>
      %29 = vector.shape_cast %26 : vector<8x32xf32> to vector<1x8x32xf32>
      tpu.vector_store %arg6[%c0_21, %c0_22, %c0_23], %29 {strides = array<i32>} : memref<1x8x32xf32, #tpu.memory_space<vmem>>, vector<1x8x32xf32>,
    } else {
    }
    return
  }
  func.func @transform_0(%arg0: i32, %arg1: i32) -> (i32, i32, i32) {
    %c0_i32 = arith.constant 0 : i32
    %c0_i32_0 = arith.constant 0 : i32
    %c0_i32_1 = arith.constant 0 : i32
    return %arg0, %c0_i32, %c0_i32_0 : i32, i32, i32
  }
  func.func @transform_1(%arg0: i32, %arg1: i32) -> (i32, i32) {
    %c0_i32 = arith.constant 0 : i32
    %c0_i32_0 = arith.constant 0 : i32
    %c0_i32_1 = arith.constant 0 : i32
    return %c0_i32, %c0_i32_0 : i32, i32
  }
  func.func @transform_2(%arg0: i32, %arg1: i32) -> (i32, i32) {
    %c0_i32 = arith.constant 0 : i32
    %c0_i32_0 = arith.constant 0 : i32
    return %c0_i32, %arg1 : i32, i32
  }
  func.func @transform_3(%arg0: i32, %arg1: i32) -> (i32, i32) {
    %c0_i32 = arith.constant 0 : i32
    %c0_i32_0 = arith.constant 0 : i32
    return %arg1, %c0_i32 : i32, i32
  }
  func.func @transform_4(%arg0: i32, %arg1: i32) -> (i32, i32, i32) {
    %c0_i32 = arith.constant 0 : i32
    %c0_i32_0 = arith.constant 0 : i32
    %c0_i32_1 = arith.constant 0 : i32
    return %arg0, %c0_i32, %c0_i32_0 : i32, i32, i32
  }
}

</mosaic_0001>

<llo_original>
// kernel: transformer_forward.6
$region0: #{transformer_forward.6}
  #allocation0 [shape = 'u32[]', space=smem, size = 0x4, offset = 0x4, fixed_abs, tag = 'smem constant byte address 0x4 - core index']
  #allocation1 [shape = 'u32[144,128]{1,0:T(1,128)}', space=vmem, size = 0x12000, scoped, tag = 'internal scratch']
  #allocation2 [shape = 'bf16[8,32]{1,0:T(8,128)(2,1)}', space=vmem, size = 0x800, scoped, tag = 'scratch operand']
  #allocation3 [shape = 'f32[8,32]{1,0:T(8,128)}', space=vmem, size = 0x1000, scoped, tag = 'scratch operand']
  %s0 = inlined_call_operand.vmem [shape: f32[2,8,32], index: 0, kind: input, shape index: {}, may-alias: {0,4}]
  %s1 = inlined_call_operand.vmem [shape: f32[1,32], index: 1, kind: input, shape index: {}]
  %s2 = inlined_call_operand.vmem [shape: bf16[32,64], index: 2, kind: input, shape index: {}]
  %s3 = inlined_call_operand.vmem [shape: bf16[64,32], index: 3, kind: input, shape index: {}]
  %s4 = inlined_call_operand.vmem [shape: f32[2,8,32], index: 4, kind: output, shape index: {}, may-alias: {0,4}]
  %s5 = sld [smem:[#allocation0]]
  $region57: #{transformer_forward.6} parent=0
    _
  %s7 = ssub.s32 1, %s5
  %s8 = scalar_select 0, %s7, %s5
  loop: start=0, step=1, limit=4
  $region2: #{transformer_forward.6} parent=0 // loop_pre_header
    _
  $region3: #{transformer_forward.6} parent=0 // loop_header
    %s10 = sphi 0, %s14
    %p11 = scmp.ge.s32.totalorder %s10, 4
    %s17 = sphi 0, %s29
    %s18 = sphi 0, %s25
    %s19 = sphi 0, %s17
    %s20 = sphi 0, %s18
    %s21 = sphi 0, %s19
    %s22 = sphi 0, %s20
    %s32 = sphi 0, %s34
    %s35 = sphi 0, %s32
    %s36 = sphi 0, %s35
    %s52 = sphi 0, %s36
    %s56 = sphi 0, %s56
    %s58 = sphi 0, %s56
    %s59 = sphi 0, %s58
    %s73 = sphi 0, %s59
    %s79 = sphi 0, %s81
    %s82 = sphi 0, %s79
    %s83 = sphi 0, %s82
    %s99 = sphi 0, %s83
    %s105 = sphi 0, %s107
    %s108 = sphi 0, %s105
    %s109 = sphi 0, %s108
    %s125 = sphi 0, %s109
    %s131 = sphi 0, %s133
    %s134 = sphi 0, %s131
    %s135 = sphi 0, %s134
    %s151 = sphi 0, %s135
  $region4: #{transformer_forward.6} parent=0 // loop_header_branch
    %13 = sbr.rel (%p11) target = $region8
  $region5: #{transformer_forward.6} parent=0 // loop_body
    %s15 = ssub.s32 %s10, 1
    %s16 = ssub.s32 %s10, 2
    %s23 = sadd.s32 1, %s18
    %p24 = scmp.ge.s32.totalorder %s23, 1
    %s25 = scalar_select %p24, 0, %s23
    %s26 = sadd.s32 1, %s17
    %s27 = scalar_select %p24, %s26, %s17
    %p28 = scmp.ge.s32.totalorder %s27, 2
    %s29 = scalar_select %p28, 0, %s27
    %s30 = ssub.s32 %s17, %s29
    %p31 = scmp.eq.s32.totalorder %s30, 0
    %s33 = sadd.s32 %s32, 1
    %s34 = scalar_select %p31, %s32, %s33
    %p37 = pneg %p31
    %p38 = scmp.eq.s32.totalorder %s10, 1
    %p39 = por %p37, %p38
    %p40 = scmp.ne.s32.totalorder %s32, %s35
    %p41 = scmp.eq.s32.totalorder %s10, 0
    %p42 = por %p40, %p41
    %p43 = scmp.ne.s32.totalorder %s32, %s35
    %p44 = scmp.eq.s32.totalorder %s15, 1
    %p45 = por %p43, %p44
    %p46 = scmp.ne.s32.totalorder %s35, %s36
    %p47 = scmp.eq.s32.totalorder %s15, 0
    %p48 = por %p46, %p47
    %p49 = scmp.ne.s32.totalorder %s35, %s36
    %p50 = scmp.eq.s32.totalorder %s16, 1
    %p51 = por %p49, %p50
    %p53 = scmp.ne.s32.totalorder %s36, %s52
    %p54 = scmp.eq.s32.totalorder %s16, 0
    %p55 = por %p53, %p54
    %s57 = sadd.s32 %s56, 1
    %p60 = scmp.eq.s32.totalorder %s10, 1
    %p61 = scmp.ne.s32.totalorder %s56, %s58
    %p62 = scmp.eq.s32.totalorder %s10, 0
    %p63 = por %p61, %p62
    %p64 = scmp.ne.s32.totalorder %s56, %s58
    %p65 = scmp.eq.s32.totalorder %s15, 1
    %p66 = por %p64, %p65
    %p67 = scmp.ne.s32.totalorder %s58, %s59
    %p68 = scmp.eq.s32.totalorder %s15, 0
    %p69 = por %p67, %p68
    %p70 = scmp.ne.s32.totalorder %s58, %s59
    %p71 = scmp.eq.s32.totalorder %s16, 1
    %p72 = por %p70, %p71
    %p74 = scmp.ne.s32.totalorder %s59, %s73
    %p75 = scmp.eq.s32.totalorder %s16, 0
    %p76 = por %p74, %p75
    %s77 = ssub.s32 %s18, %s25
    %p78 = scmp.eq.s32.totalorder %s77, 0
    %s80 = sadd.s32 %s79, 1
    %s81 = scalar_select %p78, %s79, %s80
    %p84 = pneg %p78
    %p85 = scmp.eq.s32.totalorder %s10, 1
    %p86 = por %p84, %p85
    %p87 = scmp.ne.s32.totalorder %s79, %s82
    %p88 = scmp.eq.s32.totalorder %s10, 0
    %p89 = por %p87, %p88
    %p90 = scmp.ne.s32.totalorder %s79, %s82
    %p91 = scmp.eq.s32.totalorder %s15, 1
    %p92 = por %p90, %p91
    %p93 = scmp.ne.s32.totalorder %s82, %s83
    %p94 = scmp.eq.s32.totalorder %s15, 0
    %p95 = por %p93, %p94
    %p96 = scmp.ne.s32.totalorder %s82, %s83
    %p97 = scmp.eq.s32.totalorder %s16, 1
    %p98 = por %p96, %p97
    %p100 = scmp.ne.s32.totalorder %s83, %s99
    %p101 = scmp.eq.s32.totalorder %s16, 0
    %p102 = por %p100, %p101
    %s103 = ssub.s32 %s18, %s25
    %p104 = scmp.eq.s32.totalorder %s103, 0
    %s106 = sadd.s32 %s105, 1
    %s107 = scalar_select %p104, %s105, %s106
    %p110 = pneg %p104
    %p111 = scmp.eq.s32.totalorder %s10, 1
    %p112 = por %p110, %p111
    %p113 = scmp.ne.s32.totalorder %s105, %s108
    %p114 = scmp.eq.s32.totalorder %s10, 0
    %p115 = por %p113, %p114
    %p116 = scmp.ne.s32.totalorder %s105, %s108
    %p117 = scmp.eq.s32.totalorder %s15, 1
    %p118 = por %p116, %p117
    %p119 = scmp.ne.s32.totalorder %s108, %s109
    %p120 = scmp.eq.s32.totalorder %s15, 0
    %p121 = por %p119, %p120
    %p122 = scmp.ne.s32.totalorder %s108, %s109
    %p123 = scmp.eq.s32.totalorder %s16, 1
    %p124 = por %p122, %p123
    %p126 = scmp.ne.s32.totalorder %s109, %s125
    %p127 = scmp.eq.s32.totalorder %s16, 0
    %p128 = por %p126, %p127
    %s129 = ssub.s32 %s17, %s29
    %p130 = scmp.eq.s32.totalorder %s129, 0
    %s132 = sadd.s32 %s131, 1
    %s133 = scalar_select %p130, %s131, %s132
    %p136 = pneg %p130
    %p137 = scmp.eq.s32.totalorder %s10, 1
    %p138 = por %p136, %p137
    %p139 = scmp.ne.s32.totalorder %s131, %s134
    %p140 = scmp.eq.s32.totalorder %s10, 0
    %p141 = por %p139, %p140
    %p142 = scmp.ne.s32.totalorder %s131, %s134
    %p143 = scmp.eq.s32.totalorder %s15, 1
    %p144 = por %p142, %p143
    %p145 = scmp.ne.s32.totalorder %s134, %s135
    %p146 = scmp.eq.s32.totalorder %s15, 0
    %p147 = por %p145, %p146
    %p148 = scmp.ne.s32.totalorder %s134, %s135
    %p149 = scmp.eq.s32.totalorder %s16, 1
    %p150 = por %p148, %p149
    %p152 = scmp.ne.s32.totalorder %s135, %s151
    %p153 = scmp.eq.s32.totalorder %s16, 0
    %p154 = por %p152, %p153
    %p155 = scmp.le.s32.totalorder 1, %s10
    %p156 = scmp.lt.s32.totalorder %s10, 3
    %p157 = pnand %p155, %p156
    %p158 = pneg %p157
    // Predicated region
    $region9: #{transformer_forward.6} parent=5 // pred_check
      _
    $region10: #{transformer_forward.6} parent=5 // pred_check_branch
      %160 = sbr.rel (%p157) target = $region12
    $region11: #{transformer_forward.6} parent=5 // pred_region
      %s161 = ssub.s32 %s10, 1
      // Predicated region
      $region13: #{transformer_forward.6} parent=11 // pred_check
        %p162 = pneg %p69
      $region14: #{transformer_forward.6} parent=11 // pred_check_branch
        %164 = sbr.rel (%p162) target = $region16
      $region15: #{transformer_forward.6} parent=11 // pred_region
        _
      $region16: #{transformer_forward.6} parent=11 // pred_fallthru
        _
      // Predicated region
      $region17: #{transformer_forward.6} parent=11 // pred_check
        %p165 = pneg %p95
      $region18: #{transformer_forward.6} parent=11 // pred_check_branch
        %167 = sbr.rel (%p165) target = $region20
      $region19: #{transformer_forward.6} parent=11 // pred_region
        %p168 = scmp.lt.s32.totalorder %s20, 0
        %s169 = scalar_select %p168, %s20, 0
        %s170 = smul.addr %s169, 4
        %s171 = scalar_lea.vmem %s2, %s170
      $region20: #{transformer_forward.6} parent=11 // pred_fallthru
        _
      // Predicated region
      $region21: #{transformer_forward.6} parent=11 // pred_check
        %p172 = pneg %p121
      $region22: #{transformer_forward.6} parent=11 // pred_check_branch
        %174 = sbr.rel (%p172) target = $region24
      $region23: #{transformer_forward.6} parent=11 // pred_region
        %s175 = smul.u32 8, %s20
        %p176 = scmp.lt.s32.totalorder %s175, 7
        %s177 = scalar_select %p176, %s175, 7
        %s178 = smul.addr %s177, 4
        %s179 = scalar_lea.vmem %s3, %s178
        %s180 = smul.u32 8, %s20
      $region24: #{transformer_forward.6} parent=11 // pred_fallthru
        _
    $region12: #{transformer_forward.6} parent=5 // pred_fallthru
      _
    %p181 = scmp.lt.s32.totalorder %s10, 2
    // Predicated region
    $region25: #{transformer_forward.6} parent=5 // pred_check
      %p182 = pneg %p181
    $region26: #{transformer_forward.6} parent=5 // pred_check_branch
      %184 = sbr.rel (%p182) target = $region28
    $region27: #{transformer_forward.6} parent=5 // pred_region
      // Predicated region
      $region29: #{transformer_forward.6} parent=27 // pred_check
        %p185 = pneg %p42
      $region30: #{transformer_forward.6} parent=27 // pred_check_branch
        %187 = sbr.rel (%p185) target = $region32
      $region31: #{transformer_forward.6} parent=27 // pred_region
        %p188 = scmp.lt.s32.totalorder %s17, 1
        %s189 = scalar_select %p188, %s17, 1
        %s190 = smul.addr %s189, 8
        %s191 = scalar_lea.vmem %s0, %s190
      $region32: #{transformer_forward.6} parent=27 // pred_fallthru
        _
    $region28: #{transformer_forward.6} parent=5 // pred_fallthru
      _
    %p192 = scmp.le.s32.totalorder 1, %s10
    %p193 = scmp.lt.s32.totalorder %s10, 3
    %p194 = pnand %p192, %p193
    %p195 = pneg %p194
    // Predicated region
    $region33: #{transformer_forward.6} parent=5 // pred_check
      _
    $region34: #{transformer_forward.6} parent=5 // pred_check_branch
      %197 = sbr.rel (%p194) target = $region36
    $region35: #{transformer_forward.6} parent=5 // pred_region
      %s198 = ssub.s32 %s10, 1
      %p199 = scmp.lt.s32.totalorder %s19, 1
      %s200 = scalar_select %p199, %s19, 1
      %s201 = smul.addr %s200, 8
      %s202 = scalar_lea.vmem %s0, %s201
      %p203 = pneg %p48
      %p204 = pneg %p45
      %p205 = pneg %p69
      %p206 = pneg %p66
      %p207 = scmp.lt.s32.totalorder %s20, 0
      %s208 = scalar_select %p207, %s20, 0
      %s209 = smul.addr %s208, 4
      %s210 = scalar_lea.vmem %s2, %s209
      %p211 = pneg %p95
      %p212 = pneg %p92
      %s213 = smul.u32 8, %s20
      %p214 = scmp.lt.s32.totalorder %s213, 7
      %s215 = scalar_select %p214, %s213, 7
      %s216 = smul.addr %s215, 4
      %s217 = scalar_lea.vmem %s3, %s216
      %p218 = pneg %p121
      %p219 = pneg %p118
      %p220 = pneg %p147
      %p221 = pneg %p144
      %p222 = scmp.lt.s32.totalorder %s19, 1
      %s223 = scalar_select %p222, %s19, 1
      %s224 = smul.addr %s223, 8
      %s225 = scalar_lea.vmem %s4, %s224
      %p226 = scmp.lt.s32.totalorder %s19, 1
      %s227 = scalar_select %p226, %s19, 1
      %s228 = smul.addr %s227, 8
      %s229 = scalar_lea.vmem %s0, %s228
      %p230 = scmp.lt.s32.totalorder %s20, 0
      %s231 = scalar_select %p230, %s20, 0
      %s232 = smul.addr %s231, 4
      %s233 = scalar_lea.vmem %s2, %s232
      %s234 = smul.u32 8, %s20
      %p235 = scmp.lt.s32.totalorder %s234, 7
      %s236 = scalar_select %p235, %s234, 7
      %s237 = smul.addr %s236, 4
      %s238 = scalar_lea.vmem %s3, %s237
      %s239 = smul.u32 8, %s20
      %p240 = scmp.lt.s32.totalorder %s19, 1
      %s241 = scalar_select %p240, %s19, 1
      %s242 = smul.addr %s241, 8
      %s243 = scalar_lea.vmem %s4, %s242
      %p245 = scmp.eq.s32.totalorder %s20, 0
      // Predicated region
      $region37: #{transformer_forward.6} parent=35 // pred_check
        %p246 = pneg %p245
      $region38: #{transformer_forward.6} parent=35 // pred_check_branch
        %248 = sbr.rel (%p246) target = $region40
      $region39: #{transformer_forward.6} parent=35 // pred_region
        %v249 = vld [vmem:[%s229] sm:$0xff]
        %v250 = vld [vmem:[%s1] sm:$0x1]
        %v251 = vmul.f32 %v249, %v249
        %vm252 = vcmask 261120
        %v253 = vsel %vm252, %v251, 0.0
        %254 = vadd.xlane.f32.xlu0 %v253
        %v255 = vpop.xlane.xlu0 %254
        %v256 = vrcp.pop 32.0
        %v257 = vmul.f32 %v255, %v256
        %v258 = vadd.f32 %v257, 1e-05
        %v259 = vrsqrt.pop %v258
        %v260 = vmul.f32 %v258, %v259
        %vm261 = vcmp.eq.f32.partialorder %v258, inf
        %v262 = vsel %vm261, %v258, %v260
        %vm263 = vcmp.eq.f32.partialorder %v258, 0.0
        %v264 = vand.u32 %v258, 2147483648
        %v265 = vsel %vm263, %v264, %v262
        %v266 = vrcp.pop %v265
        %v267 = vmul.f32 %v249, %v266
        %v269 = vlaneseq
        %v270 = vshrl.u32 %v269, 7
        %v271 = vsub.s32 0, %v270
        %v272 = vrot.slane %v250, %v271
        %v274 = vmul.f32 %v267, %v272
        %v275 = vpack.c.bf16 %v274, %v274
        %vm276 = vcmask 257024
        %277 = vst.msk [vmem:[#allocation2] sm:$0xf] %vm276, %v275
        %278 = vst.msk [vmem:[#allocation3] sm:$0xff] %vm252, 0.0
      $region40: #{transformer_forward.6} parent=35 // pred_fallthru
        _
      %v279 = vld [vmem:[#allocation2] sm:$0xf]
      %v280 = vld [vmem:[%s233] sm:$0xf]
      %v281 = vld [vmem:[%s233 + $0x4] sm:$0xf]
      %v282 = vld [vmem:[%s233 + $0x8] sm:$0xf]
      %v283 = vld [vmem:[%s233 + $0xc] sm:$0xf]
      %v288 = vunpack.c.l.b16 %v280
      %v289 = vunpack.c.l.b16 %v281
      %v290 = vunpack.c.l.b16 %v282
      %v291 = vunpack.c.l.b16 %v283
      %v292 = vpack.c.b16 %v289, %v288
      %v293 = vpack.c.b16 %v291, %v290
      %vm296 = vcmask 261120
      %v298 = vsel %vm296, %v279, 0
      %300 = vmatprep.subr.bf16.mxu0 0
      %301 = vmatpush1.bf16.msra.mxu0 0
      %302 = vmatprep.subr.bf16.mxu0 0
      %303 = vmatpush1.bf16.msra.mxu0 0
      %304 = vmatprep.subr.bf16.mxu0 0
      %305 = vmatpush1.bf16.msra.mxu0 0
      %306 = vmatprep.subr.bf16.mxu0 0
      %307 = vmatpush1.bf16.msra.mxu0 0
      %308 = vmatprep.subr.bf16.mxu0 0
      %309 = vmatpush1.bf16.msra.mxu0 0
      %310 = vmatprep.subr.bf16.mxu0 0
      %311 = vmatpush1.bf16.msra.mxu0 0
      %312 = vmatprep.subr.bf16.mxu0 0
      %313 = vmatpush1.bf16.msra.mxu0 %v293
      %314 = vmatprep.subr.bf16.mxu0 0
      %315 = vmatpush1.bf16.msra.mxu0 %v292
      %316 = vmatprep.subr.bf16.mxu0 0
      %317 = vmatpush2.bf16.msra.mxu0 0
      %318 = vmatprep.subr.bf16.mxu0 0
      %319 = vmatpush2.bf16.msra.mxu0 0
      %320 = vmatprep.subr.bf16.mxu0 0
      %321 = vmatpush2.bf16.msra.mxu0 0
      %322 = vmatprep.subr.bf16.mxu0 0
      %323 = vmatpush2.bf16.msra.mxu0 0
      %324 = vmatprep.subr.bf16.mxu0 0
      %325 = vmatpush2.bf16.msra.mxu0 0
      %326 = vmatprep.subr.bf16.mxu0 0
      %327 = vmatpush2.bf16.msra.mxu0 0
      %328 = vmatprep.subr.bf16.mxu0 0
      %329 = vmatpush2.bf16.msra.mxu0 0
      %330 = vmatprep.subr.bf16.mxu0 0
      %331 = vmatpush2.bf16.msra.mxu0 0
      %332 = vmatprep.mubr.bf16.mxu0 0
      %333 = vmatmul.mubr.bf16.gmra.mxu0 %v298
      %v334 = vpop.f32.mrf.mxu0
      %v335 = vadd.f32 0.0, %v334
      %v336 = vpop.f32.mrf.mxu0
      %v337 = vpop.f32.mrf.mxu0
      %v338 = vpop.f32.mrf.mxu0
      %339 = vdwg.mxu0
      %v340 = vmul.f32 %v335, 0.5
      %v341 = vmul.f32 %v335, 0.70710677
      %v342 = verf.f32.pop %v341
      %v343 = vadd.f32 %v342, 1.0
      %v344 = vmul.f32 %v340, %v343
      %v345 = vld [vmem:[#allocation3] sm:$0xff]
      %v346 = vpack.c.bf16 %v344, %v344
      %v347 = vld [vmem:[%s238] sm:$0xf]
      %v348 = vld [vmem:[%s238 + $0x4] sm:$0xf]
      %v349 = vld [vmem:[%s238 + $0x8] sm:$0xf]
      %v350 = vld [vmem:[%s238 + $0xc] sm:$0xf]
      %v351 = vld [vmem:[%s238 + $0x10] sm:$0xf]
      %v352 = vld [vmem:[%s238 + $0x14] sm:$0xf]
      %v353 = vld [vmem:[%s238 + $0x18] sm:$0xf]
      %v354 = vld [vmem:[%s238 + $0x1c] sm:$0xf]
      %v363 = vunpack.c.l.b16 %v347
      %v364 = vunpack.c.l.b16 %v348
      %v365 = vunpack.c.l.b16 %v349
      %v366 = vunpack.c.l.b16 %v350
      %v367 = vunpack.c.l.b16 %v351
      %v368 = vunpack.c.l.b16 %v352
      %v369 = vunpack.c.l.b16 %v353
      %v370 = vunpack.c.l.b16 %v354
      %v371 = vpack.c.b16 %v364, %v363
      %v372 = vpack.c.b16 %v366, %v365
      %v373 = vpack.c.b16 %v368, %v367
      %v374 = vpack.c.b16 %v370, %v369
      %vm379 = vcmask 523264
      %v381 = vsel %vm379, %v346, 0
      %383 = vmatprep.subr.bf16.mxu0 0
      %384 = vmatpush1.bf16.msra.mxu0 0
      %385 = vmatprep.subr.bf16.mxu0 0
      %386 = vmatpush1.bf16.msra.mxu0 0
      %387 = vmatprep.subr.bf16.mxu0 0
      %388 = vmatpush1.bf16.msra.mxu0 0
      %389 = vmatprep.subr.bf16.mxu0 0
      %390 = vmatpush1.bf16.msra.mxu0 0
      %391 = vmatprep.subr.bf16.mxu0 0
      %392 = vmatpush1.bf16.msra.mxu0 %v374
      %393 = vmatprep.subr.bf16.mxu0 0
      %394 = vmatpush1.bf16.msra.mxu0 %v373
      %395 = vmatprep.subr.bf16.mxu0 0
      %396 = vmatpush1.bf16.msra.mxu0 %v372
      %397 = vmatprep.subr.bf16.mxu0 0
      %398 = vmatpush1.bf16.msra.mxu0 %v371
      %399 = vmatprep.subr.bf16.mxu0 0
      %400 = vmatpush2.bf16.msra.mxu0 0
      %401 = vmatprep.subr.bf16.mxu0 0
      %402 = vmatpush2.bf16.msra.mxu0 0
      %403 = vmatprep.subr.bf16.mxu0 0
      %404 = vmatpush2.bf16.msra.mxu0 0
      %405 = vmatprep.subr.bf16.mxu0 0
      %406 = vmatpush2.bf16.msra.mxu0 0
      %407 = vmatprep.subr.bf16.mxu0 0
      %408 = vmatpush2.bf16.msra.mxu0 0
      %409 = vmatprep.subr.bf16.mxu0 0
      %410 = vmatpush2.bf16.msra.mxu0 0
      %411 = vmatprep.subr.bf16.mxu0 0
      %412 = vmatpush2.bf16.msra.mxu0 0
      %413 = vmatprep.subr.bf16.mxu0 0
      %414 = vmatpush2.bf16.msra.mxu0 0
      %415 = vmatprep.mubr.bf16.mxu0 0
      %416 = vmatmul.mubr.bf16.gmra.mxu0 %v381
      %v417 = vpop.f32.mrf.mxu0
      %v418 = vadd.f32 0.0, %v417
      %v419 = vpop.f32.mrf.mxu0
      %v420 = vpop.f32.mrf.mxu0
      %v421 = vpop.f32.mrf.mxu0
      %422 = vdwg.mxu0
      %v423 = vadd.f32 %v345, %v418
      %424 = vst.msk [vmem:[#allocation3] sm:$0xff] %vm296, %v423
      // Predicated region
      $region41: #{transformer_forward.6} parent=35 // pred_check
        %p425 = pneg %p245
      $region42: #{transformer_forward.6} parent=35 // pred_check_branch
        %427 = sbr.rel (%p425) target = $region44
      $region43: #{transformer_forward.6} parent=35 // pred_region
        %v428 = vld [vmem:[%s229] sm:$0xff]
        %v429 = vld [vmem:[#allocation3] sm:$0xff]
        %v430 = vadd.f32 %v428, %v429
        %431 = vst.msk [vmem:[%s243] sm:$0xff] %vm296, %v430
      $region44: #{transformer_forward.6} parent=35 // pred_fallthru
        _
      %p432 = scmp.lt.s32.totalorder %s19, 1
      %s433 = scalar_select %p432, %s19, 1
      %s434 = smul.addr %s433, 8
      %s435 = scalar_lea.vmem %s4, %s434
      // Predicated region
      $region45: #{transformer_forward.6} parent=35 // pred_check
        %p436 = pneg %p144
      $region46: #{transformer_forward.6} parent=35 // pred_check_branch
        %438 = sbr.rel (%p436) target = $region48
      $region47: #{transformer_forward.6} parent=35 // pred_region
        _
      $region48: #{transformer_forward.6} parent=35 // pred_fallthru
        _
    $region36: #{transformer_forward.6} parent=5 // pred_fallthru
      _
    %p439 = scmp.le.s32.totalorder 2, %s10
    // Predicated region
    $region49: #{transformer_forward.6} parent=5 // pred_check
      %p440 = pneg %p439
    $region50: #{transformer_forward.6} parent=5 // pred_check_branch
      %442 = sbr.rel (%p440) target = $region52
    $region51: #{transformer_forward.6} parent=5 // pred_region
      %s443 = ssub.s32 %s10, 2
      // Predicated region
      $region53: #{transformer_forward.6} parent=51 // pred_check
        %p444 = pneg %p150
      $region54: #{transformer_forward.6} parent=51 // pred_check_branch
        %446 = sbr.rel (%p444) target = $region56
      $region55: #{transformer_forward.6} parent=51 // pred_region
        %p447 = scmp.lt.s32.totalorder %s21, 1
        %s448 = scalar_select %p447, %s21, 1
        %s449 = smul.addr %s448, 8
        %s450 = scalar_lea.vmem %s4, %s449
      $region56: #{transformer_forward.6} parent=51 // pred_fallthru
        _
    $region52: #{transformer_forward.6} parent=5 // pred_fallthru
      _
  $region6: #{transformer_forward.6} parent=0 // loop_footer
    %s14 = sadd.s32 1, %s10
  $region7: #{transformer_forward.6} parent=0 // loop_footer_branch
    %9 = sbr.rel target = $region3
  $region8: #{transformer_forward.6} parent=0 // loop_exit
    _

// kernel: transformer_forward.9
$region0: #{transformer_forward.9}
  #allocation0 [shape = 'u32[]', space=smem, size = 0x4, offset = 0x4, fixed_abs, tag = 'smem constant byte address 0x4 - core index']
  #allocation1 [shape = 'u32[144,128]{1,0:T(1,128)}', space=vmem, size = 0x12000, scoped, tag = 'internal scratch']
  #allocation2 [shape = 'bf16[8,32]{1,0:T(8,128)(2,1)}', space=vmem, size = 0x800, scoped, tag = 'scratch operand']
  %s0 = inlined_call_operand.vmem [shape: f32[2,8,32], index: 0, kind: input, shape index: {}]
  %s1 = inlined_call_operand.vmem [shape: f32[1,32], index: 1, kind: input, shape index: {}]
  %s2 = inlined_call_operand.vmem [shape: bf16[32,128], index: 2, kind: input, shape index: {}]
  %s3 = inlined_call_operand.hbm [shape: f32[2,8,128], index: 3, kind: output, shape index: {}]
  %s4 = sld [smem:[#allocation0]]
  $region49: #{transformer_forward.9} parent=0
    _
  %s6 = ssub.s32 1, %s4
  %s7 = scalar_select 0, %s6, %s4
  $region1: #{transformer_forward.9} parent=0
    #allocation3 [shape = 'u8[8192]{0}', space=vmem, size = 0x2000, scoped, tag = 'output window, operand 0']
    #allocation4 [shape = 's32[2]{0}', space=sflag, size = 0x8, scoped, tag = 'scoped memory for transformer_forward.9']
    %8 = vsyncpa [#allocation4], 0
    %s9 = scalar_lea.sflag [#allocation4], 1
    %10 = vsyncpa %s9, 0
    loop: start=0, step=1, limit=4
    $region2: #{transformer_forward.9} parent=1 // loop_pre_header
      _
    $region3: #{transformer_forward.9} parent=1 // loop_header
      %s12 = sphi 0, %s16
      %p13 = scmp.ge.s32.totalorder %s12, 4
      %s19 = sphi 0, %s31
      %s20 = sphi 0, %s27
      %s21 = sphi 0, %s19
      %s22 = sphi 0, %s20
      %s23 = sphi 0, %s21
      %s24 = sphi 0, %s22
      %s34 = sphi 0, %s36
      %s37 = sphi 0, %s34
      %s38 = sphi 0, %s37
      %s54 = sphi 0, %s38
      %s58 = sphi 0, %s58
      %s60 = sphi 0, %s58
      %s61 = sphi 0, %s60
      %s75 = sphi 0, %s61
      %s81 = sphi 0, %s83
      %s84 = sphi 0, %s81
      %s85 = sphi 0, %s84
      %s101 = sphi 0, %s85
      %s109 = sphi 0, %s111
      %s112 = sphi 0, %s109
      %s113 = sphi 0, %s112
      %s129 = sphi 0, %s113
    $region4: #{transformer_forward.9} parent=1 // loop_header_branch
      %15 = sbr.rel (%p13) target = $region8
    $region5: #{transformer_forward.9} parent=1 // loop_body
      %s17 = ssub.s32 %s12, 1
      %s18 = ssub.s32 %s12, 2
      %s25 = sadd.s32 1, %s20
      %p26 = scmp.ge.s32.totalorder %s25, 1
      %s27 = scalar_select %p26, 0, %s25
      %s28 = sadd.s32 1, %s19
      %s29 = scalar_select %p26, %s28, %s19
      %p30 = scmp.ge.s32.totalorder %s29, 2
      %s31 = scalar_select %p30, 0, %s29
      %s32 = ssub.s32 %s19, %s31
      %p33 = scmp.eq.s32.totalorder %s32, 0
      %s35 = sadd.s32 %s34, 1
      %s36 = scalar_select %p33, %s34, %s35
      %p39 = pneg %p33
      %p40 = scmp.eq.s32.totalorder %s12, 1
      %p41 = por %p39, %p40
      %p42 = scmp.ne.s32.totalorder %s34, %s37
      %p43 = scmp.eq.s32.totalorder %s12, 0
      %p44 = por %p42, %p43
      %p45 = scmp.ne.s32.totalorder %s34, %s37
      %p46 = scmp.eq.s32.totalorder %s17, 1
      %p47 = por %p45, %p46
      %p48 = scmp.ne.s32.totalorder %s37, %s38
      %p49 = scmp.eq.s32.totalorder %s17, 0
      %p50 = por %p48, %p49
      %p51 = scmp.ne.s32.totalorder %s37, %s38
      %p52 = scmp.eq.s32.totalorder %s18, 1
      %p53 = por %p51, %p52
      %p55 = scmp.ne.s32.totalorder %s38, %s54
      %p56 = scmp.eq.s32.totalorder %s18, 0
      %p57 = por %p55, %p56
      %s59 = sadd.s32 %s58, 1
      %p62 = scmp.eq.s32.totalorder %s12, 1
      %p63 = scmp.ne.s32.totalorder %s58, %s60
      %p64 = scmp.eq.s32.totalorder %s12, 0
      %p65 = por %p63, %p64
      %p66 = scmp.ne.s32.totalorder %s58, %s60
      %p67 = scmp.eq.s32.totalorder %s17, 1
      %p68 = por %p66, %p67
      %p69 = scmp.ne.s32.totalorder %s60, %s61
      %p70 = scmp.eq.s32.totalorder %s17, 0
      %p71 = por %p69, %p70
      %p72 = scmp.ne.s32.totalorder %s60, %s61
      %p73 = scmp.eq.s32.totalorder %s18, 1
      %p74 = por %p72, %p73
      %p76 = scmp.ne.s32.totalorder %s61, %s75
      %p77 = scmp.eq.s32.totalorder %s18, 0
      %p78 = por %p76, %p77
      %s79 = ssub.s32 %s20, %s27
      %p80 = scmp.eq.s32.totalorder %s79, 0
      %s82 = sadd.s32 %s81, 1
      %s83 = scalar_select %p80, %s81, %s82
      %p86 = pneg %p80
      %p87 = scmp.eq.s32.totalorder %s12, 1
      %p88 = por %p86, %p87
      %p89 = scmp.ne.s32.totalorder %s81, %s84
      %p90 = scmp.eq.s32.totalorder %s12, 0
      %p91 = por %p89, %p90
      %p92 = scmp.ne.s32.totalorder %s81, %s84
      %p93 = scmp.eq.s32.totalorder %s17, 1
      %p94 = por %p92, %p93
      %p95 = scmp.ne.s32.totalorder %s84, %s85
      %p96 = scmp.eq.s32.totalorder %s17, 0
      %p97 = por %p95, %p96
      %p98 = scmp.ne.s32.totalorder %s84, %s85
      %p99 = scmp.eq.s32.totalorder %s18, 1
      %p100 = por %p98, %p99
      %p102 = scmp.ne.s32.totalorder %s85, %s101
      %p103 = scmp.eq.s32.totalorder %s18, 0
      %p104 = por %p102, %p103
      %s105 = ssub.s32 %s19, %s31
      %s106 = ssub.s32 %s20, %s27
      %s107 = sor.u32 %s105, %s106
      %p108 = scmp.eq.s32.totalorder %s107, 0
      %s110 = sadd.s32 %s109, 1
      %s111 = scalar_select %p108, %s109, %s110
      %p114 = pneg %p108
      %p115 = scmp.eq.s32.totalorder %s12, 1
      %p116 = por %p114, %p115
      %p117 = scmp.ne.s32.totalorder %s109, %s112
      %p118 = scmp.eq.s32.totalorder %s12, 0
      %p119 = por %p117, %p118
      %p120 = scmp.ne.s32.totalorder %s109, %s112
      %p121 = scmp.eq.s32.totalorder %s17, 1
      %p122 = por %p120, %p121
      %p123 = scmp.ne.s32.totalorder %s112, %s113
      %p124 = scmp.eq.s32.totalorder %s17, 0
      %p125 = por %p123, %p124
      %p126 = scmp.ne.s32.totalorder %s112, %s113
      %p127 = scmp.eq.s32.totalorder %s18, 1
      %p128 = por %p126, %p127
      %p130 = scmp.ne.s32.totalorder %s113, %s129
      %p131 = scmp.eq.s32.totalorder %s18, 0
      %p132 = por %p130, %p131
      %p133 = scmp.le.s32.totalorder 1, %s12
      %p134 = scmp.lt.s32.totalorder %s12, 3
      %p135 = pnand %p133, %p134
      %p136 = pneg %p135
      // Predicated region
      $region9: #{transformer_forward.9} parent=5 // pred_check
        _
      $region10: #{transformer_forward.9} parent=5 // pred_check_branch
        %138 = sbr.rel (%p135) target = $region12
      $region11: #{transformer_forward.9} parent=5 // pred_region
        %s139 = ssub.s32 %s12, 1
        // Predicated region
        $region13: #{transformer_forward.9} parent=11 // pred_check
          %p140 = pneg %p71
        $region14: #{transformer_forward.9} parent=11 // pred_check_branch
          %142 = sbr.rel (%p140) target = $region16
        $region15: #{transformer_forward.9} parent=11 // pred_region
          _
        $region16: #{transformer_forward.9} parent=11 // pred_fallthru
          _
        // Predicated region
        $region17: #{transformer_forward.9} parent=11 // pred_check
          %p143 = pneg %p97
        $region18: #{transformer_forward.9} parent=11 // pred_check_branch
          %145 = sbr.rel (%p143) target = $region20
        $region19: #{transformer_forward.9} parent=11 // pred_region
          %p146 = scmp.lt.s32.totalorder %s22, 0
          %s147 = scalar_select %p146, %s22, 0
          %s148 = smul.addr %s147, 4
          %s149 = scalar_lea.vmem %s2, %s148
        $region20: #{transformer_forward.9} parent=11 // pred_fallthru
          _
      $region12: #{transformer_forward.9} parent=5 // pred_fallthru
        _
      %p150 = scmp.lt.s32.totalorder %s12, 2
      // Predicated region
      $region21: #{transformer_forward.9} parent=5 // pred_check
        %p151 = pneg %p150
      $region22: #{transformer_forward.9} parent=5 // pred_check_branch
        %153 = sbr.rel (%p151) target = $region24
      $region23: #{transformer_forward.9} parent=5 // pred_region
        // Predicated region
        $region25: #{transformer_forward.9} parent=23 // pred_check
          %p154 = pneg %p44
        $region26: #{transformer_forward.9} parent=23 // pred_check_branch
          %156 = sbr.rel (%p154) target = $region28
        $region27: #{transformer_forward.9} parent=23 // pred_region
          %p157 = scmp.lt.s32.totalorder %s19, 1
          %s158 = scalar_select %p157, %s19, 1
          %s159 = smul.addr %s158, 8
          %s160 = scalar_lea.vmem %s0, %s159
        $region28: #{transformer_forward.9} parent=23 // pred_fallthru
          _
      $region24: #{transformer_forward.9} parent=5 // pred_fallthru
        _
      %p161 = scmp.le.s32.totalorder 1, %s12
      %p162 = scmp.lt.s32.totalorder %s12, 3
      %p163 = pnand %p161, %p162
      %p164 = pneg %p163
      // Predicated region
      $region29: #{transformer_forward.9} parent=5 // pred_check
        _
      $region30: #{transformer_forward.9} parent=5 // pred_check_branch
        %166 = sbr.rel (%p163) target = $region32
      $region31: #{transformer_forward.9} parent=5 // pred_region
        %s167 = ssub.s32 %s12, 1
        %p168 = scmp.lt.s32.totalorder %s21, 1
        %s169 = scalar_select %p168, %s21, 1
        %s170 = smul.addr %s169, 8
        %s171 = scalar_lea.vmem %s0, %s170
        %p172 = pneg %p50
        %p173 = pneg %p47
        %p174 = pneg %p71
        %p175 = pneg %p68
        %p176 = scmp.lt.s32.totalorder %s22, 0
        %s177 = scalar_select %p176, %s22, 0
        %s178 = smul.addr %s177, 4
        %s179 = scalar_lea.vmem %s2, %s178
        %p180 = pneg %p97
        %p181 = pneg %p94
        %p182 = pneg %p125
        %p183 = pneg %p122
        %s184 = sand.u32 %s112, 1
        %s185 = scalar_lea.sflag [#allocation4], %s184
        %s186 = sand.u32 %s112, 1
        %s187 = smul.addr %s186, 8
        %s188 = scalar_lea.vmem [#allocation3], %s187
        %p189 = scmp.lt.s32.totalorder %s21, 1
        %s190 = scalar_select %p189, %s21, 1
        %s191 = smul.addr %s190, 8
        %s192 = scalar_lea.vmem %s0, %s191
        %p193 = scmp.lt.s32.totalorder %s22, 0
        %s194 = scalar_select %p193, %s22, 0
        %s195 = smul.addr %s194, 4
        %s196 = scalar_lea.vmem %s2, %s195
        %p198 = scmp.eq.s32.totalorder %s22, 0
        // Predicated region
        $region33: #{transformer_forward.9} parent=31 // pred_check
          %p199 = pneg %p198
        $region34: #{transformer_forward.9} parent=31 // pred_check_branch
          %201 = sbr.rel (%p199) target = $region36
        $region35: #{transformer_forward.9} parent=31 // pred_region
          %v202 = vld [vmem:[%s192] sm:$0xff]
          %v203 = vld [vmem:[%s1] sm:$0x1]
          %v204 = vmul.f32 %v202, %v202
          %vm205 = vcmask 261120
          %v206 = vsel %vm205, %v204, 0.0
          %207 = vadd.xlane.f32.xlu0 %v206
          %v208 = vpop.xlane.xlu0 %207
          %v209 = vrcp.pop 32.0
          %v210 = vmul.f32 %v208, %v209
          %v211 = vadd.f32 %v210, 1e-05
          %v212 = vrsqrt.pop %v211
          %v213 = vmul.f32 %v211, %v212
          %vm214 = vcmp.eq.f32.partialorder %v211, inf
          %v215 = vsel %vm214, %v211, %v213
          %vm216 = vcmp.eq.f32.partialorder %v211, 0.0
          %v217 = vand.u32 %v211, 2147483648
          %v218 = vsel %vm216, %v217, %v215
          %v219 = vrcp.pop %v218
          %v220 = vmul.f32 %v202, %v219
          %v222 = vlaneseq
          %v223 = vshrl.u32 %v222, 7
          %v224 = vsub.s32 0, %v223
          %v225 = vrot.slane %v203, %v224
          %v227 = vmul.f32 %v220, %v225
          %v228 = vpack.c.bf16 %v227, %v227
          %vm229 = vcmask 257024
          %230 = vst.msk [vmem:[#allocation2] sm:$0xf] %vm229, %v228
        $region36: #{transformer_forward.9} parent=31 // pred_fallthru
          _
        %v231 = vld [vmem:[#allocation2] sm:$0xf]
        %v232 = vld [vmem:[%s196] sm:$0xf]
        %v233 = vld [vmem:[%s196 + $0x4] sm:$0xf]
        %v234 = vld [vmem:[%s196 + $0x8] sm:$0xf]
        %v235 = vld [vmem:[%s196 + $0xc] sm:$0xf]
        %v240 = vunpack.c.l.b16 %v232
        %v241 = vunpack.c.l.b16 %v233
        %v242 = vunpack.c.l.b16 %v234
        %v243 = vunpack.c.l.b16 %v235
        %v244 = vpack.c.b16 %v241, %v240
        %v245 = vpack.c.b16 %v243, %v242
        %vm248 = vcmask 261120
        %v250 = vsel %vm248, %v231, 0
        %252 = vmatprep.subr.bf16.mxu0 0
        %253 = vmatpush1.bf16.msra.mxu0 0
        %254 = vmatprep.subr.bf16.mxu0 0
        %255 = vmatpush1.bf16.msra.mxu0 0
        %256 = vmatprep.subr.bf16.mxu0 0
        %257 = vmatpush1.bf16.msra.mxu0 0
        %258 = vmatprep.subr.bf16.mxu0 0
        %259 = vmatpush1.bf16.msra.mxu0 0
        %260 = vmatprep.subr.bf16.mxu0 0
        %261 = vmatpush1.bf16.msra.mxu0 0
        %262 = vmatprep.subr.bf16.mxu0 0
        %263 = vmatpush1.bf16.msra.mxu0 0
        %264 = vmatprep.subr.bf16.mxu0 0
        %265 = vmatpush1.bf16.msra.mxu0 %v245
        %266 = vmatprep.subr.bf16.mxu0 0
        %267 = vmatpush1.bf16.msra.mxu0 %v244
        %268 = vmatprep.subr.bf16.mxu0 0
        %269 = vmatpush2.bf16.msra.mxu0 0
        %270 = vmatprep.subr.bf16.mxu0 0
        %271 = vmatpush2.bf16.msra.mxu0 0
        %272 = vmatprep.subr.bf16.mxu0 0
        %273 = vmatpush2.bf16.msra.mxu0 0
        %274 = vmatprep.subr.bf16.mxu0 0
        %275 = vmatpush2.bf16.msra.mxu0 0
        %276 = vmatprep.subr.bf16.mxu0 0
        %277 = vmatpush2.bf16.msra.mxu0 0
        %278 = vmatprep.subr.bf16.mxu0 0
        %279 = vmatpush2.bf16.msra.mxu0 0
        %280 = vmatprep.subr.bf16.mxu0 0
        %281 = vmatpush2.bf16.msra.mxu0 0
        %282 = vmatprep.subr.bf16.mxu0 0
        %283 = vmatpush2.bf16.msra.mxu0 0
        %284 = vmatprep.mubr.bf16.mxu0 0
        %285 = vmatmul.mubr.bf16.gmra.mxu0 %v250
        %v286 = vpop.f32.mrf.mxu0
        %v287 = vadd.f32 0.0, %v286
        %v288 = vpop.f32.mrf.mxu0
        %v289 = vpop.f32.mrf.mxu0
        %v290 = vpop.f32.mrf.mxu0
        %291 = vdwg.mxu0
        %292 = vst [vmem:[%s188] sm:$0xff] %v287
        %s293 = sand.u32 %s112, 1
        %s294 = scalar_lea.sflag [#allocation4], %s293
        %s295 = sand.u32 %s112, 1
        %s296 = smul.addr %s295, 8
        %s297 = scalar_lea.vmem [#allocation3], %s296
        // Predicated region
        $region37: #{transformer_forward.9} parent=31 // pred_check
          %p298 = pneg %p122
        $region38: #{transformer_forward.9} parent=31 // pred_check_branch
          %300 = sbr.rel (%p298) target = $region40
        $region39: #{transformer_forward.9} parent=31 // pred_region
          %s302 = ssub.s32 128, 128
          %303 = vsyncadd %s294, %s302
          %s304 = sadd.s32 %s22, %s21
          %s305 = smul.addr %s304, 128
          %s306 = scalar_lea.hbm %s3, %s305
          %s308 = sshll.u32 %s297, 4
          %s309 = int_to_ptr.vmem [resolvable:$true] %s308
          %311 = dma.vmem_to_hbm [thread:$0]  %s309, 128, %s306, %s294
        $region40: #{transformer_forward.9} parent=31 // pred_fallthru
          _
      $region32: #{transformer_forward.9} parent=5 // pred_fallthru
        _
      %p312 = scmp.le.s32.totalorder 2, %s12
      // Predicated region
      $region41: #{transformer_forward.9} parent=5 // pred_check
        %p313 = pneg %p312
      $region42: #{transformer_forward.9} parent=5 // pred_check_branch
        %315 = sbr.rel (%p313) target = $region44
      $region43: #{transformer_forward.9} parent=5 // pred_region
        %s316 = ssub.s32 %s12, 2
        // Predicated region
        $region45: #{transformer_forward.9} parent=43 // pred_check
          %p317 = pneg %p128
        $region46: #{transformer_forward.9} parent=43 // pred_check_branch
          %319 = sbr.rel (%p317) target = $region48
        $region47: #{transformer_forward.9} parent=43 // pred_region
          %s320 = sand.u32 %s113, 1
          %s321 = scalar_lea.sflag [#allocation4], %s320
          %s322 = sand.u32 %s113, 1
          %s323 = smul.addr %s322, 8
          %s324 = scalar_lea.vmem [#allocation3], %s323
          %325 = dma.done %s321, 128
        $region48: #{transformer_forward.9} parent=43 // pred_fallthru
          _
      $region44: #{transformer_forward.9} parent=5 // pred_fallthru
        _
    $region6: #{transformer_forward.9} parent=1 // loop_footer
      %s16 = sadd.s32 1, %s12
    $region7: #{transformer_forward.9} parent=1 // loop_footer_branch
      %11 = sbr.rel target = $region3
    $region8: #{transformer_forward.9} parent=1 // loop_exit
      _
    %326 = vsyncpa [#allocation4], 1
    %s327 = scalar_lea.sflag [#allocation4], 1
    %328 = vsyncpa %s327, 1

// kernel: transformer_forward.5
$region0: #{transformer_forward.5}
  #allocation0 [shape = 'u32[]', space=smem, size = 0x4, offset = 0x4, fixed_abs, tag = 'smem constant byte address 0x4 - core index']
  #allocation1 [shape = 'u32[144,128]{1,0:T(1,128)}', space=vmem, size = 0x12000, scoped, tag = 'internal scratch']
  #allocation2 [shape = 'f32[8,96]{1,0:T(8,128)}', space=vmem, size = 0x1000, scoped, tag = 'scratch operand']
  #allocation3 [shape = 'f32[8,32]{1,0:T(8,128)}', space=vmem, size = 0x1000, scoped, tag = 'scratch operand']
  %s0 = inlined_call_operand.vmem [shape: f32[2,8,32], index: 0, kind: input, shape index: {}, may-alias: {0,4}]
  %s1 = inlined_call_operand.vmem [shape: f32[1,32], index: 1, kind: input, shape index: {}]
  %s2 = inlined_call_operand.vmem [shape: bf16[32,96], index: 2, kind: input, shape index: {}]
  %s3 = inlined_call_operand.vmem [shape: bf16[32,32], index: 3, kind: input, shape index: {}]
  %s4 = inlined_call_operand.vmem [shape: f32[2,8,32], index: 4, kind: output, shape index: {}, may-alias: {0,4}]
  %s5 = sld [smem:[#allocation0]]
  $region49: #{transformer_forward.5} parent=0
    _
  %s7 = ssub.s32 1, %s5
  %s8 = scalar_select 0, %s7, %s5
  loop: start=0, step=1, limit=4
  $region2: #{transformer_forward.5} parent=0 // loop_pre_header
    _
  $region3: #{transformer_forward.5} parent=0 // loop_header
    %s10 = sphi 0, %s14
    %p11 = scmp.ge.s32.totalorder %s10, 4
    %s20 = sphi 0, %s22
    %s23 = sphi 0, %s20
    %s24 = sphi 0, %s23
    %s40 = sphi 0, %s24
    %s44 = sphi 0, %s44
    %s46 = sphi 0, %s44
    %s47 = sphi 0, %s46
    %s61 = sphi 0, %s47
    %s65 = sphi 0, %s65
    %s67 = sphi 0, %s65
    %s68 = sphi 0, %s67
    %s82 = sphi 0, %s68
    %s86 = sphi 0, %s86
    %s88 = sphi 0, %s86
    %s89 = sphi 0, %s88
    %s103 = sphi 0, %s89
    %s109 = sphi 0, %s111
    %s112 = sphi 0, %s109
    %s113 = sphi 0, %s112
    %s129 = sphi 0, %s113
  $region4: #{transformer_forward.5} parent=0 // loop_header_branch
    %13 = sbr.rel (%p11) target = $region8
  $region5: #{transformer_forward.5} parent=0 // loop_body
    %s15 = ssub.s32 %s10, 1
    %s16 = ssub.s32 %s10, 2
    %s17 = sadd.s32 %s10, 1
    %s18 = ssub.s32 %s10, %s17
    %p19 = scmp.eq.s32.totalorder %s18, 0
    %s21 = sadd.s32 %s20, 1
    %s22 = scalar_select %p19, %s20, %s21
    %p25 = pneg %p19
    %p26 = scmp.eq.s32.totalorder %s10, 1
    %p27 = por %p25, %p26
    %p28 = scmp.ne.s32.totalorder %s20, %s23
    %p29 = scmp.eq.s32.totalorder %s10, 0
    %p30 = por %p28, %p29
    %p31 = scmp.ne.s32.totalorder %s20, %s23
    %p32 = scmp.eq.s32.totalorder %s15, 1
    %p33 = por %p31, %p32
    %p34 = scmp.ne.s32.totalorder %s23, %s24
    %p35 = scmp.eq.s32.totalorder %s15, 0
    %p36 = por %p34, %p35
    %p37 = scmp.ne.s32.totalorder %s23, %s24
    %p38 = scmp.eq.s32.totalorder %s16, 1
    %p39 = por %p37, %p38
    %p41 = scmp.ne.s32.totalorder %s24, %s40
    %p42 = scmp.eq.s32.totalorder %s16, 0
    %p43 = por %p41, %p42
    %s45 = sadd.s32 %s44, 1
    %p48 = scmp.eq.s32.totalorder %s10, 1
    %p49 = scmp.ne.s32.totalorder %s44, %s46
    %p50 = scmp.eq.s32.totalorder %s10, 0
    %p51 = por %p49, %p50
    %p52 = scmp.ne.s32.totalorder %s44, %s46
    %p53 = scmp.eq.s32.totalorder %s15, 1
    %p54 = por %p52, %p53
    %p55 = scmp.ne.s32.totalorder %s46, %s47
    %p56 = scmp.eq.s32.totalorder %s15, 0
    %p57 = por %p55, %p56
    %p58 = scmp.ne.s32.totalorder %s46, %s47
    %p59 = scmp.eq.s32.totalorder %s16, 1
    %p60 = por %p58, %p59
    %p62 = scmp.ne.s32.totalorder %s47, %s61
    %p63 = scmp.eq.s32.totalorder %s16, 0
    %p64 = por %p62, %p63
    %s66 = sadd.s32 %s65, 1
    %p69 = scmp.eq.s32.totalorder %s10, 1
    %p70 = scmp.ne.s32.totalorder %s65, %s67
    %p71 = scmp.eq.s32.totalorder %s10, 0
    %p72 = por %p70, %p71
    %p73 = scmp.ne.s32.totalorder %s65, %s67
    %p74 = scmp.eq.s32.totalorder %s15, 1
    %p75 = por %p73, %p74
    %p76 = scmp.ne.s32.totalorder %s67, %s68
    %p77 = scmp.eq.s32.totalorder %s15, 0
    %p78 = por %p76, %p77
    %p79 = scmp.ne.s32.totalorder %s67, %s68
    %p80 = scmp.eq.s32.totalorder %s16, 1
    %p81 = por %p79, %p80
    %p83 = scmp.ne.s32.totalorder %s68, %s82
    %p84 = scmp.eq.s32.totalorder %s16, 0
    %p85 = por %p83, %p84
    %s87 = sadd.s32 %s86, 1
    %p90 = scmp.eq.s32.totalorder %s10, 1
    %p91 = scmp.ne.s32.totalorder %s86, %s88
    %p92 = scmp.eq.s32.totalorder %s10, 0
    %p93 = por %p91, %p92
    %p94 = scmp.ne.s32.totalorder %s86, %s88
    %p95 = scmp.eq.s32.totalorder %s15, 1
    %p96 = por %p94, %p95
    %p97 = scmp.ne.s32.totalorder %s88, %s89
    %p98 = scmp.eq.s32.totalorder %s15, 0
    %p99 = por %p97, %p98
    %p100 = scmp.ne.s32.totalorder %s88, %s89
    %p101 = scmp.eq.s32.totalorder %s16, 1
    %p102 = por %p100, %p101
    %p104 = scmp.ne.s32.totalorder %s89, %s103
    %p105 = scmp.eq.s32.totalorder %s16, 0
    %p106 = por %p104, %p105
    %s107 = ssub.s32 %s10, %s17
    %p108 = scmp.eq.s32.totalorder %s107, 0
    %s110 = sadd.s32 %s109, 1
    %s111 = scalar_select %p108, %s109, %s110
    %p114 = pneg %p108
    %p115 = scmp.eq.s32.totalorder %s10, 1
    %p116 = por %p114, %p115
    %p117 = scmp.ne.s32.totalorder %s109, %s112
    %p118 = scmp.eq.s32.totalorder %s10, 0
    %p119 = por %p117, %p118
    %p120 = scmp.ne.s32.totalorder %s109, %s112
    %p121 = scmp.eq.s32.totalorder %s15, 1
    %p122 = por %p120, %p121
    %p123 = scmp.ne.s32.totalorder %s112, %s113
    %p124 = scmp.eq.s32.totalorder %s15, 0
    %p125 = por %p123, %p124
    %p126 = scmp.ne.s32.totalorder %s112, %s113
    %p127 = scmp.eq.s32.totalorder %s16, 1
    %p128 = por %p126, %p127
    %p130 = scmp.ne.s32.totalorder %s113, %s129
    %p131 = scmp.eq.s32.totalorder %s16, 0
    %p132 = por %p130, %p131
    %p133 = scmp.le.s32.totalorder 1, %s10
    %p134 = scmp.lt.s32.totalorder %s10, 3
    %p135 = pnand %p133, %p134
    %p136 = pneg %p135
    // Predicated region
    $region9: #{transformer_forward.5} parent=5 // pred_check
      _
    $region10: #{transformer_forward.5} parent=5 // pred_check_branch
      %138 = sbr.rel (%p135) target = $region12
    $region11: #{transformer_forward.5} parent=5 // pred_region
      %s139 = ssub.s32 %s10, 1
      // Predicated region
      $region13: #{transformer_forward.5} parent=11 // pred_check
        %p140 = pneg %p57
      $region14: #{transformer_forward.5} parent=11 // pred_check_branch
        %142 = sbr.rel (%p140) target = $region16
      $region15: #{transformer_forward.5} parent=11 // pred_region
        _
      $region16: #{transformer_forward.5} parent=11 // pred_fallthru
        _
      // Predicated region
      $region17: #{transformer_forward.5} parent=11 // pred_check
        %p143 = pneg %p78
      $region18: #{transformer_forward.5} parent=11 // pred_check_branch
        %145 = sbr.rel (%p143) target = $region20
      $region19: #{transformer_forward.5} parent=11 // pred_region
        _
      $region20: #{transformer_forward.5} parent=11 // pred_fallthru
        _
      // Predicated region
      $region21: #{transformer_forward.5} parent=11 // pred_check
        %p146 = pneg %p99
      $region22: #{transformer_forward.5} parent=11 // pred_check_branch
        %148 = sbr.rel (%p146) target = $region24
      $region23: #{transformer_forward.5} parent=11 // pred_region
        _
      $region24: #{transformer_forward.5} parent=11 // pred_fallthru
        _
    $region12: #{transformer_forward.5} parent=5 // pred_fallthru
      _
    %p149 = scmp.lt.s32.totalorder %s10, 2
    // Predicated region
    $region25: #{transformer_forward.5} parent=5 // pred_check
      %p150 = pneg %p149
    $region26: #{transformer_forward.5} parent=5 // pred_check_branch
      %152 = sbr.rel (%p150) target = $region28
    $region27: #{transformer_forward.5} parent=5 // pred_region
      // Predicated region
      $region29: #{transformer_forward.5} parent=27 // pred_check
        %p153 = pneg %p30
      $region30: #{transformer_forward.5} parent=27 // pred_check_branch
        %155 = sbr.rel (%p153) target = $region32
      $region31: #{transformer_forward.5} parent=27 // pred_region
        %p156 = scmp.lt.s32.totalorder %s10, 1
        %s157 = scalar_select %p156, %s10, 1
        %s158 = smul.addr %s157, 8
        %s159 = scalar_lea.vmem %s0, %s158
      $region32: #{transformer_forward.5} parent=27 // pred_fallthru
        _
    $region28: #{transformer_forward.5} parent=5 // pred_fallthru
      _
    %p160 = scmp.le.s32.totalorder 1, %s10
    %p161 = scmp.lt.s32.totalorder %s10, 3
    %p162 = pnand %p160, %p161
    %p163 = pneg %p162
    // Predicated region
    $region33: #{transformer_forward.5} parent=5 // pred_check
      _
    $region34: #{transformer_forward.5} parent=5 // pred_check_branch
      %165 = sbr.rel (%p162) target = $region36
    $region35: #{transformer_forward.5} parent=5 // pred_region
      %s166 = ssub.s32 %s10, 1
      %p167 = scmp.lt.s32.totalorder %s15, 1
      %s168 = scalar_select %p167, %s15, 1
      %s169 = smul.addr %s168, 8
      %s170 = scalar_lea.vmem %s0, %s169
      %p171 = pneg %p36
      %p172 = pneg %p33
      %p173 = pneg %p57
      %p174 = pneg %p54
      %p175 = pneg %p78
      %p176 = pneg %p75
      %p177 = pneg %p99
      %p178 = pneg %p96
      %p179 = pneg %p125
      %p180 = pneg %p122
      %p181 = scmp.lt.s32.totalorder %s15, 1
      %s182 = scalar_select %p181, %s15, 1
      %s183 = smul.addr %s182, 8
      %s184 = scalar_lea.vmem %s4, %s183
      %p185 = scmp.lt.s32.totalorder %s15, 1
      %s186 = scalar_select %p185, %s15, 1
      %s187 = smul.addr %s186, 8
      %s188 = scalar_lea.vmem %s0, %s187
      %p189 = scmp.lt.s32.totalorder %s15, 1
      %s190 = scalar_select %p189, %s15, 1
      %s191 = smul.addr %s190, 8
      %s192 = scalar_lea.vmem %s4, %s191
      %v194 = vld [vmem:[%s188] sm:$0xff]
      %v195 = vld [vmem:[%s1] sm:$0x1]
      %v196 = vmul.f32 %v194, %v194
      %vm197 = vcmask 261120
      %v198 = vsel %vm197, %v196, 0.0
      %199 = vadd.xlane.f32.xlu0 %v198
      %v200 = vpop.xlane.xlu0 %199
      %v201 = vrcp.pop 32.0
      %v202 = vmul.f32 %v200, %v201
      %v203 = vadd.f32 %v202, 1e-05
      %v204 = vrsqrt.pop %v203
      %v205 = vmul.f32 %v203, %v204
      %vm206 = vcmp.eq.f32.partialorder %v203, inf
      %v207 = vsel %vm206, %v203, %v205
      %vm208 = vcmp.eq.f32.partialorder %v203, 0.0
      %v209 = vand.u32 %v203, 2147483648
      %v210 = vsel %vm208, %v209, %v207
      %v211 = vrcp.pop %v210
      %v212 = vmul.f32 %v194, %v211
      %v214 = vlaneseq
      %v215 = vshrl.u32 %v214, 7
      %v216 = vsub.s32 0, %v215
      %v217 = vrot.slane %v195, %v216
      %v219 = vmul.f32 %v212, %v217
      %v220 = vpack.c.bf16 %v219, %v219
      %v221 = vld [vmem:[%s2] sm:$0xf]
      %v222 = vld [vmem:[%s2 + $0x4] sm:$0xf]
      %v223 = vld [vmem:[%s2 + $0x8] sm:$0xf]
      %v224 = vld [vmem:[%s2 + $0xc] sm:$0xf]
      %v229 = vunpack.c.l.b16 %v221
      %v230 = vunpack.c.l.b16 %v222
      %v231 = vunpack.c.l.b16 %v223
      %v232 = vunpack.c.l.b16 %v224
      %v233 = vpack.c.b16 %v230, %v229
      %v234 = vpack.c.b16 %v232, %v231
      %v238 = vsel %vm197, %v220, 0
      %240 = vmatprep.subr.bf16.mxu0 0
      %241 = vmatpush1.bf16.msra.mxu0 0
      %242 = vmatprep.subr.bf16.mxu0 0
      %243 = vmatpush1.bf16.msra.mxu0 0
      %244 = vmatprep.subr.bf16.mxu0 0
      %245 = vmatpush1.bf16.msra.mxu0 0
      %246 = vmatprep.subr.bf16.mxu0 0
      %247 = vmatpush1.bf16.msra.mxu0 0
      %248 = vmatprep.subr.bf16.mxu0 0
      %249 = vmatpush1.bf16.msra.mxu0 0
      %250 = vmatprep.subr.bf16.mxu0 0
      %251 = vmatpush1.bf16.msra.mxu0 0
      %252 = vmatprep.subr.bf16.mxu0 0
      %253 = vmatpush1.bf16.msra.mxu0 %v234
      %254 = vmatprep.subr.bf16.mxu0 0
      %255 = vmatpush1.bf16.msra.mxu0 %v233
      %256 = vmatprep.subr.bf16.mxu0 0
      %257 = vmatpush2.bf16.msra.mxu0 0
      %258 = vmatprep.subr.bf16.mxu0 0
      %259 = vmatpush2.bf16.msra.mxu0 0
      %260 = vmatprep.subr.bf16.mxu0 0
      %261 = vmatpush2.bf16.msra.mxu0 0
      %262 = vmatprep.subr.bf16.mxu0 0
      %263 = vmatpush2.bf16.msra.mxu0 0
      %264 = vmatprep.subr.bf16.mxu0 0
      %265 = vmatpush2.bf16.msra.mxu0 0
      %266 = vmatprep.subr.bf16.mxu0 0
      %267 = vmatpush2.bf16.msra.mxu0 0
      %268 = vmatprep.subr.bf16.mxu0 0
      %269 = vmatpush2.bf16.msra.mxu0 0
      %270 = vmatprep.subr.bf16.mxu0 0
      %271 = vmatpush2.bf16.msra.mxu0 0
      %272 = vmatprep.mubr.bf16.mxu0 0
      %273 = vmatmul.mubr.bf16.gmra.mxu0 %v238
      %v274 = vpop.f32.mrf.mxu0
      %v275 = vadd.f32 0.0, %v274
      %v276 = vpop.f32.mrf.mxu0
      %v277 = vpop.f32.mrf.mxu0
      %v278 = vpop.f32.mrf.mxu0
      %279 = vdwg.mxu0
      %vm280 = vcmask 785408
      %281 = vst.msk [vmem:[#allocation2] sm:$0xff] %vm280, %v275
      %v282 = vlaneseq
      %v283 = vshrl.u32 %v282, 7
      %v284 = vlaneseq
      %v285 = vand.u32 %v284, 127
      %v286 = vld [vmem:[#allocation2] sm:$0xff]
      %v287 = vpack.c.bf16 %v286, %v286
      %v288 = vld [vmem:[#allocation2] sm:$0xff]
      %v289 = vpack.c.bf16 %v288, %v288
      %291 = vrot.lane.b32.xlu0 %v289, 96
      %v292 = vpop.permute.xlu0 %291
      %vm293 = vcmask 64512
      %v295 = vsel %vm293, %v287, 0
      %v298 = vsel %vm293, %v292, 0
      %300 = vmatprep.subr.bf16.mxu0 0
      %301 = vmatpush1.bf16.xpose.msra.mxu0 0
      %302 = vmatprep.subr.bf16.mxu0 0
      %303 = vmatpush1.bf16.xpose.msra.mxu0 0
      %304 = vmatprep.subr.bf16.mxu0 0
      %305 = vmatpush1.bf16.xpose.msra.mxu0 0
      %306 = vmatprep.subr.bf16.mxu0 0
      %307 = vmatpush1.bf16.xpose.msra.mxu0 0
      %308 = vmatprep.subr.bf16.mxu0 0
      %309 = vmatpush1.bf16.xpose.msra.mxu0 0
      %310 = vmatprep.subr.bf16.mxu0 0
      %311 = vmatpush1.bf16.xpose.msra.mxu0 0
      %312 = vmatprep.subr.bf16.mxu0 0
      %313 = vmatpush1.bf16.xpose.msra.mxu0 0
      %314 = vmatprep.subr.bf16.mxu0 0
      %315 = vmatpush1.bf16.xpose.msra.mxu0 %v298
      %316 = vmatprep.subr.bf16.mxu0 0
      %317 = vmatpush2.bf16.xpose.msra.mxu0 0
      %318 = vmatprep.subr.bf16.mxu0 0
      %319 = vmatpush2.bf16.xpose.msra.mxu0 0
      %320 = vmatprep.subr.bf16.mxu0 0
      %321 = vmatpush2.bf16.xpose.msra.mxu0 0
      %322 = vmatprep.subr.bf16.mxu0 0
      %323 = vmatpush2.bf16.xpose.msra.mxu0 0
      %324 = vmatprep.subr.bf16.mxu0 0
      %325 = vmatpush2.bf16.xpose.msra.mxu0 0
      %326 = vmatprep.subr.bf16.mxu0 0
      %327 = vmatpush2.bf16.xpose.msra.mxu0 0
      %328 = vmatprep.subr.bf16.mxu0 0
      %329 = vmatpush2.bf16.xpose.msra.mxu0 0
      %330 = vmatprep.subr.bf16.mxu0 0
      %331 = vmatpush2.bf16.xpose.msra.mxu0 0
      %332 = vmatprep.mubr.bf16.mxu0 0
      %333 = vmatmul.mubr.bf16.gmra.mxu0 %v295
      %v334 = vpop.f32.mrf.mxu0
      %v335 = vadd.f32 0.0, %v334
      %v336 = vpop.f32.mrf.mxu0
      %v337 = vpop.f32.mrf.mxu0
      %v338 = vpop.f32.mrf.mxu0
      %339 = vdwg.mxu0
      %v340 = vstv 0
      %v341 = vadd.s32 %v285, %v340
      %vm342 = vcmp.gt.s32.totalorder %v341, %v283
      %v343 = vsel %vm342, -1e+30, %v335
      %v344 = vsel %vm293, %v343, -inf
      %345 = vmax.xlane.f32.xlu0 %v344
      %v346 = vpop.xlane.xlu0 %345
      %v347 = vmax.f32 %v346, -1e+30
      %v348 = vsub.f32 -1e+30, %v347
      %v349 = vmul.f32 %v348, 1.442695
      %v350 = vpow.pop %v349
      %v351 = vsub.f32 %v343, %v347
      %v352 = vmul.f32 %v351, 1.442695
      %v353 = vpow.pop %v352
      %v354 = vmul.f32 %v350, 0.0
      %v355 = vsel %vm293, %v353, 0.0
      %356 = vadd.xlane.f32.xlu0 %v355
      %v357 = vpop.xlane.xlu0 %356
      %v358 = vadd.f32 %v354, %v357
      %v359 = vpack.c.bf16 %v353, %v353
      %360 = vrot.lane.b32.xlu0 %v289, 64
      %v361 = vpop.permute.xlu0 %360
      %v363 = vsel %vm293, %v359, 0
      %vm365 = vcmask 1043456
      %v367 = vsel %vm365, %v361, 0
      %369 = vmatprep.subr.bf16.mxu0 0
      %370 = vmatpush1.bf16.msra.mxu0 0
      %371 = vmatprep.subr.bf16.mxu0 0
      %372 = vmatpush1.bf16.msra.mxu0 0
      %373 = vmatprep.subr.bf16.mxu0 0
      %374 = vmatpush1.bf16.msra.mxu0 0
      %375 = vmatprep.subr.bf16.mxu0 0
      %376 = vmatpush1.bf16.msra.mxu0 0
      %377 = vmatprep.subr.bf16.mxu0 0
      %378 = vmatpush1.bf16.msra.mxu0 0
      %379 = vmatprep.subr.bf16.mxu0 0
      %380 = vmatpush1.bf16.msra.mxu0 0
      %381 = vmatprep.subr.bf16.mxu0 0
      %382 = vmatpush1.bf16.msra.mxu0 0
      %383 = vmatprep.subr.bf16.mxu0 0
      %384 = vmatpush1.bf16.msra.mxu0 %v367
      %385 = vmatprep.subr.bf16.mxu0 0
      %386 = vmatpush2.bf16.msra.mxu0 0
      %387 = vmatprep.subr.bf16.mxu0 0
      %388 = vmatpush2.bf16.msra.mxu0 0
      %389 = vmatprep.subr.bf16.mxu0 0
      %390 = vmatpush2.bf16.msra.mxu0 0
      %391 = vmatprep.subr.bf16.mxu0 0
      %392 = vmatpush2.bf16.msra.mxu0 0
      %393 = vmatprep.subr.bf16.mxu0 0
      %394 = vmatpush2.bf16.msra.mxu0 0
      %395 = vmatprep.subr.bf16.mxu0 0
      %396 = vmatpush2.bf16.msra.mxu0 0
      %397 = vmatprep.subr.bf16.mxu0 0
      %398 = vmatpush2.bf16.msra.mxu0 0
      %399 = vmatprep.subr.bf16.mxu0 0
      %400 = vmatpush2.bf16.msra.mxu0 0
      %401 = vmatprep.mubr.bf16.mxu0 0
      %402 = vmatmul.mubr.bf16.gmra.mxu0 %v363
      %v403 = vpop.f32.mrf.mxu0
      %v404 = vadd.f32 0.0, %v403
      %v405 = vpop.f32.mrf.mxu0
      %v406 = vpop.f32.mrf.mxu0
      %v407 = vpop.f32.mrf.mxu0
      %408 = vdwg.mxu0
      %v409 = vadd.f32 %v354, %v404
      %v410 = vrcp.pop %v358
      %v411 = vmul.f32 %v409, %v410
      %412 = vst.msk [vmem:[#allocation3] sm:$0xff] %vm293, %v411
      %v413 = vld [vmem:[#allocation2] sm:$0xff]
      %v414 = vpack.c.bf16 %v413, %v413
      %v415 = vld [vmem:[#allocation2] sm:$0xff]
      %v416 = vpack.c.bf16 %v415, %v415
      %418 = vrot.lane.b32.xlu0 %v414, 120
      %v419 = vpop.permute.xlu0 %418
      %421 = vrot.lane.b32.xlu0 %v416, 88
      %v422 = vpop.permute.xlu0 %421
      %v424 = vsel %vm293, %v419, 0
      %v427 = vsel %vm293, %v422, 0
      %429 = vmatprep.subr.bf16.mxu0 0
      %430 = vmatpush1.bf16.xpose.msra.mxu0 0
      %431 = vmatprep.subr.bf16.mxu0 0
      %432 = vmatpush1.bf16.xpose.msra.mxu0 0
      %433 = vmatprep.subr.bf16.mxu0 0
      %434 = vmatpush1.bf16.xpose.msra.mxu0 0
      %435 = vmatprep.subr.bf16.mxu0 0
      %436 = vmatpush1.bf16.xpose.msra.mxu0 0
      %437 = vmatprep.subr.bf16.mxu0 0
      %438 = vmatpush1.bf16.xpose.msra.mxu0 0
      %439 = vmatprep.subr.bf16.mxu0 0
      %440 = vmatpush1.bf16.xpose.msra.mxu0 0
      %441 = vmatprep.subr.bf16.mxu0 0
      %442 = vmatpush1.bf16.xpose.msra.mxu0 0
      %443 = vmatprep.subr.bf16.mxu0 0
      %444 = vmatpush1.bf16.xpose.msra.mxu0 %v427
      %445 = vmatprep.subr.bf16.mxu0 0
      %446 = vmatpush2.bf16.xpose.msra.mxu0 0
      %447 = vmatprep.subr.bf16.mxu0 0
      %448 = vmatpush2.bf16.xpose.msra.mxu0 0
      %449 = vmatprep.subr.bf16.mxu0 0
      %450 = vmatpush2.bf16.xpose.msra.mxu0 0
      %451 = vmatprep.subr.bf16.mxu0 0
      %452 = vmatpush2.bf16.xpose.msra.mxu0 0
      %453 = vmatprep.subr.bf16.mxu0 0
      %454 = vmatpush2.bf16.xpose.msra.mxu0 0
      %455 = vmatprep.subr.bf16.mxu0 0
      %456 = vmatpush2.bf16.xpose.msra.mxu0 0
      %457 = vmatprep.subr.bf16.mxu0 0
      %458 = vmatpush2.bf16.xpose.msra.mxu0 0
      %459 = vmatprep.subr.bf16.mxu0 0
      %460 = vmatpush2.bf16.xpose.msra.mxu0 0
      %461 = vmatprep.mubr.bf16.mxu0 0
      %462 = vmatmul.mubr.bf16.gmra.mxu0 %v424
      %v463 = vpop.f32.mrf.mxu0
      %v464 = vadd.f32 0.0, %v463
      %v465 = vpop.f32.mrf.mxu0
      %v466 = vpop.f32.mrf.mxu0
      %v467 = vpop.f32.mrf.mxu0
      %468 = vdwg.mxu0
      %v469 = vsel %vm342, -1e+30, %v464
      %v470 = vsel %vm293, %v469, -inf
      %471 = vmax.xlane.f32.xlu0 %v470
      %v472 = vpop.xlane.xlu0 %471
      %v473 = vmax.f32 %v472, -1e+30
      %v474 = vsub.f32 -1e+30, %v473
      %v475 = vmul.f32 %v474, 1.442695
      %v476 = vpow.pop %v475
      %v477 = vsub.f32 %v469, %v473
      %v478 = vmul.f32 %v477, 1.442695
      %v479 = vpow.pop %v478
      %v480 = vmul.f32 %v476, 0.0
      %v481 = vsel %vm293, %v479, 0.0
      %482 = vadd.xlane.f32.xlu0 %v481
      %v483 = vpop.xlane.xlu0 %482
      %v484 = vadd.f32 %v480, %v483
      %v485 = vpack.c.bf16 %v479, %v479
      %486 = vrot.lane.b32.xlu0 %v416, 56
      %v487 = vpop.permute.xlu0 %486
      %v489 = vsel %vm293, %v485, 0
      %v492 = vsel %vm365, %v487, 0
      %494 = vmatprep.subr.bf16.mxu0 0
      %495 = vmatpush1.bf16.msra.mxu0 0
      %496 = vmatprep.subr.bf16.mxu0 0
      %497 = vmatpush1.bf16.msra.mxu0 0
      %498 = vmatprep.subr.bf16.mxu0 0
      %499 = vmatpush1.bf16.msra.mxu0 0
      %500 = vmatprep.subr.bf16.mxu0 0
      %501 = vmatpush1.bf16.msra.mxu0 0
      %502 = vmatprep.subr.bf16.mxu0 0
      %503 = vmatpush1.bf16.msra.mxu0 0
      %504 = vmatprep.subr.bf16.mxu0 0
      %505 = vmatpush1.bf16.msra.mxu0 0
      %506 = vmatprep.subr.bf16.mxu0 0
      %507 = vmatpush1.bf16.msra.mxu0 0
      %508 = vmatprep.subr.bf16.mxu0 0
      %509 = vmatpush1.bf16.msra.mxu0 %v492
      %510 = vmatprep.subr.bf16.mxu0 0
      %511 = vmatpush2.bf16.msra.mxu0 0
      %512 = vmatprep.subr.bf16.mxu0 0
      %513 = vmatpush2.bf16.msra.mxu0 0
      %514 = vmatprep.subr.bf16.mxu0 0
      %515 = vmatpush2.bf16.msra.mxu0 0
      %516 = vmatprep.subr.bf16.mxu0 0
      %517 = vmatpush2.bf16.msra.mxu0 0
      %518 = vmatprep.subr.bf16.mxu0 0
      %519 = vmatpush2.bf16.msra.mxu0 0
      %520 = vmatprep.subr.bf16.mxu0 0
      %521 = vmatpush2.bf16.msra.mxu0 0
      %522 = vmatprep.subr.bf16.mxu0 0
      %523 = vmatpush2.bf16.msra.mxu0 0
      %524 = vmatprep.subr.bf16.mxu0 0
      %525 = vmatpush2.bf16.msra.mxu0 0
      %526 = vmatprep.mubr.bf16.mxu0 0
      %527 = vmatmul.mubr.bf16.gmra.mxu0 %v489
      %v528 = vpop.f32.mrf.mxu0
      %v529 = vadd.f32 0.0, %v528
      %v530 = vpop.f32.mrf.mxu0
      %v531 = vpop.f32.mrf.mxu0
      %v532 = vpop.f32.mrf.mxu0
      %533 = vdwg.mxu0
      %v534 = vadd.f32 %v480, %v529
      %v535 = vrcp.pop %v484
      %v536 = vmul.f32 %v534, %v535
      %538 = vrot.lane.b32.xlu0 %v536, 8
      %v539 = vpop.permute.xlu0 %538
      %vm541 = vcmask 130112
      %542 = vst.msk [vmem:[#allocation3] sm:$0xff] %vm541, %v539
      %v543 = vld [vmem:[#allocation2] sm:$0xff]
      %v544 = vpack.c.bf16 %v543, %v543
      %v545 = vld [vmem:[#allocation2] sm:$0xff]
      %v546 = vpack.c.bf16 %v545, %v545
      %548 = vrot.lane.b32.xlu0 %v544, 112
      %v549 = vpop.permute.xlu0 %548
      %551 = vrot.lane.b32.xlu0 %v546, 80
      %v552 = vpop.permute.xlu0 %551
      %v554 = vsel %vm293, %v549, 0
      %v557 = vsel %vm293, %v552, 0
      %559 = vmatprep.subr.bf16.mxu0 0
      %560 = vmatpush1.bf16.xpose.msra.mxu0 0
      %561 = vmatprep.subr.bf16.mxu0 0
      %562 = vmatpush1.bf16.xpose.msra.mxu0 0
      %563 = vmatprep.subr.bf16.mxu0 0
      %564 = vmatpush1.bf16.xpose.msra.mxu0 0
      %565 = vmatprep.subr.bf16.mxu0 0
      %566 = vmatpush1.bf16.xpose.msra.mxu0 0
      %567 = vmatprep.subr.bf16.mxu0 0
      %568 = vmatpush1.bf16.xpose.msra.mxu0 0
      %569 = vmatprep.subr.bf16.mxu0 0
      %570 = vmatpush1.bf16.xpose.msra.mxu0 0
      %571 = vmatprep.subr.bf16.mxu0 0
      %572 = vmatpush1.bf16.xpose.msra.mxu0 0
      %573 = vmatprep.subr.bf16.mxu0 0
      %574 = vmatpush1.bf16.xpose.msra.mxu0 %v557
      %575 = vmatprep.subr.bf16.mxu0 0
      %576 = vmatpush2.bf16.xpose.msra.mxu0 0
      %577 = vmatprep.subr.bf16.mxu0 0
      %578 = vmatpush2.bf16.xpose.msra.mxu0 0
      %579 = vmatprep.subr.bf16.mxu0 0
      %580 = vmatpush2.bf16.xpose.msra.mxu0 0
      %581 = vmatprep.subr.bf16.mxu0 0
      %582 = vmatpush2.bf16.xpose.msra.mxu0 0
      %583 = vmatprep.subr.bf16.mxu0 0
      %584 = vmatpush2.bf16.xpose.msra.mxu0 0
      %585 = vmatprep.subr.bf16.mxu0 0
      %586 = vmatpush2.bf16.xpose.msra.mxu0 0
      %587 = vmatprep.subr.bf16.mxu0 0
      %588 = vmatpush2.bf16.xpose.msra.mxu0 0
      %589 = vmatprep.subr.bf16.mxu0 0
      %590 = vmatpush2.bf16.xpose.msra.mxu0 0
      %591 = vmatprep.mubr.bf16.mxu0 0
      %592 = vmatmul.mubr.bf16.gmra.mxu0 %v554
      %v593 = vpop.f32.mrf.mxu0
      %v594 = vadd.f32 0.0, %v593
      %v595 = vpop.f32.mrf.mxu0
      %v596 = vpop.f32.mrf.mxu0
      %v597 = vpop.f32.mrf.mxu0
      %598 = vdwg.mxu0
      %v599 = vsel %vm342, -1e+30, %v594
      %v600 = vsel %vm293, %v599, -inf
      %601 = vmax.xlane.f32.xlu0 %v600
      %v602 = vpop.xlane.xlu0 %601
      %v603 = vmax.f32 %v602, -1e+30
      %v604 = vsub.f32 -1e+30, %v603
      %v605 = vmul.f32 %v604, 1.442695
      %v606 = vpow.pop %v605
      %v607 = vsub.f32 %v599, %v603
      %v608 = vmul.f32 %v607, 1.442695
      %v609 = vpow.pop %v608
      %v610 = vmul.f32 %v606, 0.0
      %v611 = vsel %vm293, %v609, 0.0
      %612 = vadd.xlane.f32.xlu0 %v611
      %v613 = vpop.xlane.xlu0 %612
      %v614 = vadd.f32 %v610, %v613
      %v615 = vpack.c.bf16 %v609, %v609
      %616 = vrot.lane.b32.xlu0 %v546, 48
      %v617 = vpop.permute.xlu0 %616
      %v619 = vsel %vm293, %v615, 0
      %v622 = vsel %vm365, %v617, 0
      %624 = vmatprep.subr.bf16.mxu0 0
      %625 = vmatpush1.bf16.msra.mxu0 0
      %626 = vmatprep.subr.bf16.mxu0 0
      %627 = vmatpush1.bf16.msra.mxu0 0
      %628 = vmatprep.subr.bf16.mxu0 0
      %629 = vmatpush1.bf16.msra.mxu0 0
      %630 = vmatprep.subr.bf16.mxu0 0
      %631 = vmatpush1.bf16.msra.mxu0 0
      %632 = vmatprep.subr.bf16.mxu0 0
      %633 = vmatpush1.bf16.msra.mxu0 0
      %634 = vmatprep.subr.bf16.mxu0 0
      %635 = vmatpush1.bf16.msra.mxu0 0
      %636 = vmatprep.subr.bf16.mxu0 0
      %637 = vmatpush1.bf16.msra.mxu0 0
      %638 = vmatprep.subr.bf16.mxu0 0
      %639 = vmatpush1.bf16.msra.mxu0 %v622
      %640 = vmatprep.subr.bf16.mxu0 0
      %641 = vmatpush2.bf16.msra.mxu0 0
      %642 = vmatprep.subr.bf16.mxu0 0
      %643 = vmatpush2.bf16.msra.mxu0 0
      %644 = vmatprep.subr.bf16.mxu0 0
      %645 = vmatpush2.bf16.msra.mxu0 0
      %646 = vmatprep.subr.bf16.mxu0 0
      %647 = vmatpush2.bf16.msra.mxu0 0
      %648 = vmatprep.subr.bf16.mxu0 0
      %649 = vmatpush2.bf16.msra.mxu0 0
      %650 = vmatprep.subr.bf16.mxu0 0
      %651 = vmatpush2.bf16.msra.mxu0 0
      %652 = vmatprep.subr.bf16.mxu0 0
      %653 = vmatpush2.bf16.msra.mxu0 0
      %654 = vmatprep.subr.bf16.mxu0 0
      %655 = vmatpush2.bf16.msra.mxu0 0
      %656 = vmatprep.mubr.bf16.mxu0 0
      %657 = vmatmul.mubr.bf16.gmra.mxu0 %v619
      %v658 = vpop.f32.mrf.mxu0
      %v659 = vadd.f32 0.0, %v658
      %v660 = vpop.f32.mrf.mxu0
      %v661 = vpop.f32.mrf.mxu0
      %v662 = vpop.f32.mrf.mxu0
      %663 = vdwg.mxu0
      %v664 = vadd.f32 %v610, %v659
      %v665 = vrcp.pop %v614
      %v666 = vmul.f32 %v664, %v665
      %668 = vrot.lane.b32.xlu0 %v666, 16
      %v669 = vpop.permute.xlu0 %668
      %vm671 = vcmask 195712
      %672 = vst.msk [vmem:[#allocation3] sm:$0xff] %vm671, %v669
      %v673 = vld [vmem:[#allocation2] sm:$0xff]
      %v674 = vpack.c.bf16 %v673, %v673
      %v675 = vld [vmem:[#allocation2] sm:$0xff]
      %v676 = vpack.c.bf16 %v675, %v675
      %678 = vrot.lane.b32.xlu0 %v674, 104
      %v679 = vpop.permute.xlu0 %678
      %681 = vrot.lane.b32.xlu0 %v676, 72
      %v682 = vpop.permute.xlu0 %681
      %v684 = vsel %vm293, %v679, 0
      %v687 = vsel %vm293, %v682, 0
      %689 = vmatprep.subr.bf16.mxu0 0
      %690 = vmatpush1.bf16.xpose.msra.mxu0 0
      %691 = vmatprep.subr.bf16.mxu0 0
      %692 = vmatpush1.bf16.xpose.msra.mxu0 0
      %693 = vmatprep.subr.bf16.mxu0 0
      %694 = vmatpush1.bf16.xpose.msra.mxu0 0
      %695 = vmatprep.subr.bf16.mxu0 0
      %696 = vmatpush1.bf16.xpose.msra.mxu0 0
      %697 = vmatprep.subr.bf16.mxu0 0
      %698 = vmatpush1.bf16.xpose.msra.mxu0 0
      %699 = vmatprep.subr.bf16.mxu0 0
      %700 = vmatpush1.bf16.xpose.msra.mxu0 0
      %701 = vmatprep.subr.bf16.mxu0 0
      %702 = vmatpush1.bf16.xpose.msra.mxu0 0
      %703 = vmatprep.subr.bf16.mxu0 0
      %704 = vmatpush1.bf16.xpose.msra.mxu0 %v687
      %705 = vmatprep.subr.bf16.mxu0 0
      %706 = vmatpush2.bf16.xpose.msra.mxu0 0
      %707 = vmatprep.subr.bf16.mxu0 0
      %708 = vmatpush2.bf16.xpose.msra.mxu0 0
      %709 = vmatprep.subr.bf16.mxu0 0
      %710 = vmatpush2.bf16.xpose.msra.mxu0 0
      %711 = vmatprep.subr.bf16.mxu0 0
      %712 = vmatpush2.bf16.xpose.msra.mxu0 0
      %713 = vmatprep.subr.bf16.mxu0 0
      %714 = vmatpush2.bf16.xpose.msra.mxu0 0
      %715 = vmatprep.subr.bf16.mxu0 0
      %716 = vmatpush2.bf16.xpose.msra.mxu0 0
      %717 = vmatprep.subr.bf16.mxu0 0
      %718 = vmatpush2.bf16.xpose.msra.mxu0 0
      %719 = vmatprep.subr.bf16.mxu0 0
      %720 = vmatpush2.bf16.xpose.msra.mxu0 0
      %721 = vmatprep.mubr.bf16.mxu0 0
      %722 = vmatmul.mubr.bf16.gmra.mxu0 %v684
      %v723 = vpop.f32.mrf.mxu0
      %v724 = vadd.f32 0.0, %v723
      %v725 = vpop.f32.mrf.mxu0
      %v726 = vpop.f32.mrf.mxu0
      %v727 = vpop.f32.mrf.mxu0
      %728 = vdwg.mxu0
      %v729 = vsel %vm342, -1e+30, %v724
      %v730 = vsel %vm293, %v729, -inf
      %731 = vmax.xlane.f32.xlu0 %v730
      %v732 = vpop.xlane.xlu0 %731
      %v733 = vmax.f32 %v732, -1e+30
      %v734 = vsub.f32 -1e+30, %v733
      %v735 = vmul.f32 %v734, 1.442695
      %v736 = vpow.pop %v735
      %v737 = vsub.f32 %v729, %v733
      %v738 = vmul.f32 %v737, 1.442695
      %v739 = vpow.pop %v738
      %v740 = vmul.f32 %v736, 0.0
      %v741 = vsel %vm293, %v739, 0.0
      %742 = vadd.xlane.f32.xlu0 %v741
      %v743 = vpop.xlane.xlu0 %742
      %v744 = vadd.f32 %v740, %v743
      %v745 = vpack.c.bf16 %v739, %v739
      %746 = vrot.lane.b32.xlu0 %v676, 40
      %v747 = vpop.permute.xlu0 %746
      %v749 = vsel %vm293, %v745, 0
      %v752 = vsel %vm365, %v747, 0
      %754 = vmatprep.subr.bf16.mxu0 0
      %755 = vmatpush1.bf16.msra.mxu0 0
      %756 = vmatprep.subr.bf16.mxu0 0
      %757 = vmatpush1.bf16.msra.mxu0 0
      %758 = vmatprep.subr.bf16.mxu0 0
      %759 = vmatpush1.bf16.msra.mxu0 0
      %760 = vmatprep.subr.bf16.mxu0 0
      %761 = vmatpush1.bf16.msra.mxu0 0
      %762 = vmatprep.subr.bf16.mxu0 0
      %763 = vmatpush1.bf16.msra.mxu0 0
      %764 = vmatprep.subr.bf16.mxu0 0
      %765 = vmatpush1.bf16.msra.mxu0 0
      %766 = vmatprep.subr.bf16.mxu0 0
      %767 = vmatpush1.bf16.msra.mxu0 0
      %768 = vmatprep.subr.bf16.mxu0 0
      %769 = vmatpush1.bf16.msra.mxu0 %v752
      %770 = vmatprep.subr.bf16.mxu0 0
      %771 = vmatpush2.bf16.msra.mxu0 0
      %772 = vmatprep.subr.bf16.mxu0 0
      %773 = vmatpush2.bf16.msra.mxu0 0
      %774 = vmatprep.subr.bf16.mxu0 0
      %775 = vmatpush2.bf16.msra.mxu0 0
      %776 = vmatprep.subr.bf16.mxu0 0
      %777 = vmatpush2.bf16.msra.mxu0 0
      %778 = vmatprep.subr.bf16.mxu0 0
      %779 = vmatpush2.bf16.msra.mxu0 0
      %780 = vmatprep.subr.bf16.mxu0 0
      %781 = vmatpush2.bf16.msra.mxu0 0
      %782 = vmatprep.subr.bf16.mxu0 0
      %783 = vmatpush2.bf16.msra.mxu0 0
      %784 = vmatprep.subr.bf16.mxu0 0
      %785 = vmatpush2.bf16.msra.mxu0 0
      %786 = vmatprep.mubr.bf16.mxu0 0
      %787 = vmatmul.mubr.bf16.gmra.mxu0 %v749
      %v788 = vpop.f32.mrf.mxu0
      %v789 = vadd.f32 0.0, %v788
      %v790 = vpop.f32.mrf.mxu0
      %v791 = vpop.f32.mrf.mxu0
      %v792 = vpop.f32.mrf.mxu0
      %793 = vdwg.mxu0
      %v794 = vadd.f32 %v740, %v789
      %v795 = vrcp.pop %v744
      %v796 = vmul.f32 %v794, %v795
      %798 = vrot.lane.b32.xlu0 %v796, 24
      %v799 = vpop.permute.xlu0 %798
      %vm801 = vcmask 261312
      %802 = vst.msk [vmem:[#allocation3] sm:$0xff] %vm801, %v799
      %v803 = vld [vmem:[#allocation3] sm:$0xff]
      %v804 = vpack.c.bf16 %v803, %v803
      %v805 = vld [vmem:[%s3] sm:$0xf]
      %v806 = vld [vmem:[%s3 + $0x4] sm:$0xf]
      %v807 = vld [vmem:[%s3 + $0x8] sm:$0xf]
      %v808 = vld [vmem:[%s3 + $0xc] sm:$0xf]
      %v813 = vunpack.c.l.b16 %v805
      %v814 = vunpack.c.l.b16 %v806
      %v815 = vunpack.c.l.b16 %v807
      %v816 = vunpack.c.l.b16 %v808
      %v817 = vpack.c.b16 %v814, %v813
      %v818 = vpack.c.b16 %v816, %v815
      %v822 = vsel %vm197, %v804, 0
      %824 = vmatprep.subr.bf16.mxu0 0
      %825 = vmatpush1.bf16.msra.mxu0 0
      %826 = vmatprep.subr.bf16.mxu0 0
      %827 = vmatpush1.bf16.msra.mxu0 0
      %828 = vmatprep.subr.bf16.mxu0 0
      %829 = vmatpush1.bf16.msra.mxu0 0
      %830 = vmatprep.subr.bf16.mxu0 0
      %831 = vmatpush1.bf16.msra.mxu0 0
      %832 = vmatprep.subr.bf16.mxu0 0
      %833 = vmatpush1.bf16.msra.mxu0 0
      %834 = vmatprep.subr.bf16.mxu0 0
      %835 = vmatpush1.bf16.msra.mxu0 0
      %836 = vmatprep.subr.bf16.mxu0 0
      %837 = vmatpush1.bf16.msra.mxu0 %v818
      %838 = vmatprep.subr.bf16.mxu0 0
      %839 = vmatpush1.bf16.msra.mxu0 %v817
      %840 = vmatprep.subr.bf16.mxu0 0
      %841 = vmatpush2.bf16.msra.mxu0 0
      %842 = vmatprep.subr.bf16.mxu0 0
      %843 = vmatpush2.bf16.msra.mxu0 0
      %844 = vmatprep.subr.bf16.mxu0 0
      %845 = vmatpush2.bf16.msra.mxu0 0
      %846 = vmatprep.subr.bf16.mxu0 0
      %847 = vmatpush2.bf16.msra.mxu0 0
      %848 = vmatprep.subr.bf16.mxu0 0
      %849 = vmatpush2.bf16.msra.mxu0 0
      %850 = vmatprep.subr.bf16.mxu0 0
      %851 = vmatpush2.bf16.msra.mxu0 0
      %852 = vmatprep.subr.bf16.mxu0 0
      %853 = vmatpush2.bf16.msra.mxu0 0
      %854 = vmatprep.subr.bf16.mxu0 0
      %855 = vmatpush2.bf16.msra.mxu0 0
      %856 = vmatprep.mubr.bf16.mxu0 0
      %857 = vmatmul.mubr.bf16.gmra.mxu0 %v822
      %v858 = vpop.f32.mrf.mxu0
      %v859 = vadd.f32 0.0, %v858
      %v860 = vpop.f32.mrf.mxu0
      %v861 = vpop.f32.mrf.mxu0
      %v862 = vpop.f32.mrf.mxu0
      %863 = vdwg.mxu0
      %v864 = vadd.f32 %v194, %v859
      %865 = vst.msk [vmem:[%s192] sm:$0xff] %vm197, %v864
      %p866 = scmp.lt.s32.totalorder %s15, 1
      %s867 = scalar_select %p866, %s15, 1
      %s868 = smul.addr %s867, 8
      %s869 = scalar_lea.vmem %s4, %s868
      // Predicated region
      $region37: #{transformer_forward.5} parent=35 // pred_check
        %p870 = pneg %p122
      $region38: #{transformer_forward.5} parent=35 // pred_check_branch
        %872 = sbr.rel (%p870) target = $region40
      $region39: #{transformer_forward.5} parent=35 // pred_region
        _
      $region40: #{transformer_forward.5} parent=35 // pred_fallthru
        _
    $region36: #{transformer_forward.5} parent=5 // pred_fallthru
      _
    %p873 = scmp.le.s32.totalorder 2, %s10
    // Predicated region
    $region41: #{transformer_forward.5} parent=5 // pred_check
      %p874 = pneg %p873
    $region42: #{transformer_forward.5} parent=5 // pred_check_branch
      %876 = sbr.rel (%p874) target = $region44
    $region43: #{transformer_forward.5} parent=5 // pred_region
      %s877 = ssub.s32 %s10, 2
      // Predicated region
      $region45: #{transformer_forward.5} parent=43 // pred_check
        %p878 = pneg %p128
      $region46: #{transformer_forward.5} parent=43 // pred_check_branch
        %880 = sbr.rel (%p878) target = $region48
      $region47: #{transformer_forward.5} parent=43 // pred_region
        %p881 = scmp.lt.s32.totalorder %s16, 1
        %s882 = scalar_select %p881, %s16, 1
        %s883 = smul.addr %s882, 8
        %s884 = scalar_lea.vmem %s4, %s883
      $region48: #{transformer_forward.5} parent=43 // pred_fallthru
        _
    $region44: #{transformer_forward.5} parent=5 // pred_fallthru
      _
  $region6: #{transformer_forward.5} parent=0 // loop_footer
    %s14 = sadd.s32 1, %s10
  $region7: #{transformer_forward.5} parent=0 // loop_footer_branch
    %9 = sbr.rel target = $region3
  $region8: #{transformer_forward.5} parent=0 // loop_exit
    _

</llo_original>
